<compile_context>
chip_gen: v7x
topology: tpu7x:2x2x1
jax: 0.10.0
libtpu: 0.0.40
codegen_flags: <defaults>
</compile_context>

<pallas_src>
import functools

import jax
import jax.numpy as jnp
from jax import lax
from jax.experimental import pallas as pl
from jax.experimental.pallas import tpu as pltpu


def _round_up(a, m):
    return (a + m - 1) // m * m


def _lstm_kernel(x_ref,      # (t_chunk, b_tile, D)  f32 (streamed chunk)
                 w_ih_ref,   # (D, 4*Hp)             bf16 (resident)
                 b_ref,      # (1, 4*Hp)             f32  (b_ih + b_hh)
                 w_hh_ref,   # (Hp, 4*Hp)            bf16 (resident)
                 w_fc_ref,   # (1, Hp)               f32
                 b_fc_ref,   # (1, 1)                f32
                 out_ref,    # (b_tile, 1)           f32
                 gin_sc,     # (t_chunk, b_tile, 4*Hp) f32 scratch
                 h_sc,       # (b_tile, Hp)          bf16 scratch (persists)
                 c_sc,       # (b_tile, Hp)          f32  scratch (persists)
                 *, seq_len, t_chunk, mask_tail, unroll):
    t_idx = pl.program_id(1)
    b_tile, Hp = c_sc.shape
    D = x_ref.shape[-1]

    @pl.when(t_idx == 0)
    def _init():
        h_sc[...] = jnp.zeros_like(h_sc)
        c_sc[...] = jnp.zeros_like(c_sc)

    # Fused input projection for this time chunk: one MXU GEMM,
    # bf16 operands, f32 accumulation, bias folded in once.
    xc = x_ref[...].reshape(t_chunk * b_tile, D).astype(jnp.bfloat16)
    gin = jnp.dot(xc, w_ih_ref[...], preferred_element_type=jnp.float32)
    gin = gin + b_ref[...]
    gin_sc[...] = gin.reshape(t_chunk, b_tile, 4 * Hp)

    w_hh = w_hh_ref[...]          # resident bf16 recurrent weights

    def step(t, carry):
        h, c = carry              # h: bf16, c: f32
        gates = gin_sc[t] + jnp.dot(h, w_hh, preferred_element_type=jnp.float32)
        # Gate order (i, f, o, g): one contiguous sigmoid over 3*Hp lanes.
        sig = jax.nn.sigmoid(gates[:, :3 * Hp])
        i_g = sig[:, 0 * Hp:1 * Hp]
        f_g = sig[:, 1 * Hp:2 * Hp]
        o_g = sig[:, 2 * Hp:3 * Hp]
        g_g = jnp.tanh(gates[:, 3 * Hp:4 * Hp])
        c_new = f_g * c + i_g * g_g
        h_new = o_g * jnp.tanh(c_new)
        if mask_tail:             # static flag: S was padded to S_pad
            valid = (t_idx * t_chunk + t) < seq_len
            c_new = jnp.where(valid, c_new, c)
            h_new = jnp.where(valid, h_new, h.astype(jnp.float32))
        return h_new.astype(jnp.bfloat16), c_new

    h, c = lax.fori_loop(0, t_chunk, step, (h_sc[...], c_sc[...]),
                         unroll=unroll)
    h_sc[...] = h
    c_sc[...] = c

    @pl.when(t_idx == pl.num_programs(1) - 1)
    def _epilogue():
        # Dropout(0.3) is identity in eval mode.
        # Linear(H, 1): VPU multiply + lane reduction (no 1-column MXU dot).
        logits = jnp.sum(h.astype(jnp.float32) * w_fc_ref[...],
                         axis=-1, keepdims=True) + b_fc_ref[...]
        out_ref[...] = jax.nn.sigmoid(logits)


def _pad_reorder_gates(a, H, Hp):
    """(4H, ...) -> (4Hp, ...): PyTorch gate order (i,f,g,o) -> (i,f,o,g),
    each gate block zero-padded from H to Hp rows."""
    g = a.reshape((4, H) + a.shape[1:])
    g = g[jnp.array([0, 1, 3, 2])]
    pad = [(0, 0), (0, Hp - H)] + [(0, 0)] * (a.ndim - 1)
    return jnp.pad(g, pad).reshape((4 * Hp,) + a.shape[1:])


def _tpu_budget():
    kind = ""
    try:
        kind = jax.devices()[0].device_kind.lower()
    except Exception:
        pass
    is_v7 = ("v7" in kind) or ("7x" in kind)
    vmem_budget = (40 if is_v7 else 96) * 1024 * 1024   # v7x: 64 MiB physical
    return is_v7, vmem_budget


@jax.jit
def lstm_net_forward(x, w_ih, w_hh, b_ih, b_hh, w_fc, b_fc):
    """x: (B, S, D) float32 (batch_first, as in PyTorch). Returns (B,) float32."""
    B, S, D = x.shape
    H = w_hh.shape[1]
    Hp = _round_up(H, 128)
    bf16 = jnp.bfloat16

    is_v7, vmem_budget = _tpu_budget()

    # --- batch tiling: pad B to sublanes; 2 tiles only for v7x's 2 TCs ---
    n_btiles = 2 if (is_v7 and B >= 16) else 1
    B_pad = _round_up(B, 8 * n_btiles)
    b_tile = B_pad // n_btiles

    # --- time chunking from the per-generation VMEM budget ---
    per_step = b_tile * (2 * D * 4 + 4 * Hp * 4)       # x (dbl-buf, f32) + gin scratch (f32)
    fixed = (2 * D * 4 * Hp * 2 +                      # W_ih bf16 (x2 buffers)
             2 * Hp * 4 * Hp * 2 +                     # W_hh bf16 (x2)
             2 * (4 * Hp + Hp + 1) * 4 +               # bias, w_fc, b_fc f32 (x2)
             b_tile * Hp * (2 + 4) +                   # h (bf16) + c (f32) scratch
             2 * b_tile * 4)                           # out (x2)
    t_chunk = int(max(1, min(S, 128, (vmem_budget - fixed) // per_step)))
    S_pad = _round_up(S, t_chunk)
    n_tchunks = S_pad // t_chunk
    mask_tail = S_pad != S
    unroll = min(t_chunk, 8)

    # --- weight preprocessing (tiny tensors) ---
    w_ih_k = _pad_reorder_gates(w_ih.astype(jnp.float32), H, Hp).T.astype(bf16)    # (D, 4Hp)
    b_k = _pad_reorder_gates((b_ih + b_hh).astype(jnp.float32), H, Hp)[None, :]    # (1, 4Hp)
    w_hh_k = jnp.pad(_pad_reorder_gates(w_hh.astype(jnp.float32), H, Hp).T,
                     ((0, Hp - H), (0, 0))).astype(bf16)                           # (Hp, 4Hp)
    w_fc_k = jnp.pad(w_fc.astype(jnp.float32), ((0, 0), (0, Hp - H)))              # (1, Hp)
    b_fc_k = b_fc.reshape(1, 1).astype(jnp.float32)                                # (1, 1)

    # --- x: pad batch/time, time-major; streamed chunk-by-chunk into VMEM ---
    x_pad = jnp.pad(x.astype(jnp.float32),
                    ((0, B_pad - B), (0, S_pad - S), (0, 0)))
    x_t = jnp.transpose(x_pad, (1, 0, 2))                                          # (S_pad, B_pad, D)

    kernel = functools.partial(_lstm_kernel, seq_len=S, t_chunk=t_chunk,
                               mask_tail=mask_tail, unroll=unroll)

    out = pl.pallas_call(
        kernel,
        out_shape=jax.ShapeDtypeStruct((B_pad, 1), jnp.float32),
        grid=(n_btiles, n_tchunks),
        in_specs=[
            pl.BlockSpec((t_chunk, b_tile, D), lambda b, s: (s, b, 0)),   # x (streamed)
            pl.BlockSpec((D, 4 * Hp),          lambda b, s: (0, 0)),      # W_ih (resident)
            pl.BlockSpec((1, 4 * Hp),          lambda b, s: (0, 0)),      # bias
            pl.BlockSpec((Hp, 4 * Hp),         lambda b, s: (0, 0)),      # W_hh (resident)
            pl.BlockSpec((1, Hp),              lambda b, s: (0, 0)),      # W_fc
            pl.BlockSpec((1, 1),               lambda b, s: (0, 0)),      # b_fc
        ],
        out_specs=pl.BlockSpec((b_tile, 1), lambda b, s: (b, 0)),
        scratch_shapes=[
            pltpu.VMEM((t_chunk, b_tile, 4 * Hp), jnp.float32),   # gin chunk
            pltpu.VMEM((b_tile, Hp), jnp.bfloat16),               # h
            pltpu.VMEM((b_tile, Hp), jnp.float32),                # c
        ],
        compiler_params=pltpu.CompilerParams(
            dimension_semantics=("parallel", "arbitrary"),
            vmem_limit_bytes=int(vmem_budget)),
    )(x_t, w_ih_k, b_k, w_hh_k, w_fc_k, b_fc_k)

    return out[:B, 0]                                             # .squeeze(-1)


def _reference(x, w_ih, w_hh, b_ih, b_hh, w_fc, b_fc):
    """Plain-JAX reference (torch.nn.LSTM math, eval mode), mirroring the
    kernel's precision choices (bf16 matmul operands, bf16 h carry)."""
    B, S, D = x.shape
    H = w_hh.shape[1]
    bf = jnp.bfloat16
    gin = jnp.einsum('bsd,gd->bsg', x.astype(bf), w_ih.astype(bf),
                     preferred_element_type=jnp.float32) + (b_ih + b_hh)
    h = jnp.zeros((B, H), jnp.float32)
    c = jnp.zeros((B, H), jnp.float32)
    for t in range(S):
        g = gin[:, t, :] + jnp.dot(h.astype(bf), w_hh.T.astype(bf),
                                   preferred_element_type=jnp.float32)
        i = jax.nn.sigmoid(g[:, 0 * H:1 * H])
        f = jax.nn.sigmoid(g[:, 1 * H:2 * H])
        gg = jnp.tanh(g[:, 2 * H:3 * H])
        o = jax.nn.sigmoid(g[:, 3 * H:4 * H])
        c = f * c + i * gg
        h = (o * jnp.tanh(c)).astype(bf).astype(jnp.float32)   # mirror bf16 h carry
    logits = jnp.sum(h * w_fc, axis=-1) + b_fc
    return jax.nn.sigmoid(logits)


if __name__ == "__main__":
    # Small shapes consistent with the module: x = (batch, seq, input_size)
    B, S, D, H = 2, 8, 16, 32

    key = jax.random.PRNGKey(0)
    k = jax.random.split(key, 7)
    scale = 1.0 / jnp.sqrt(jnp.float32(H))   # PyTorch-style uniform(-1/sqrt(H), 1/sqrt(H))

    x = jax.random.normal(k[0], (B, S, D), jnp.float32)
    w_ih = jax.random.uniform(k[1], (4 * H, D), jnp.float32, -scale, scale)
    w_hh = jax.random.uniform(k[2], (4 * H, H), jnp.float32, -scale, scale)
    b_ih = jax.random.uniform(k[3], (4 * H,), jnp.float32, -scale, scale)
    b_hh = jax.random.uniform(k[4], (4 * H,), jnp.float32, -scale, scale)
    w_fc = jax.random.uniform(k[5], (1, H), jnp.float32, -scale, scale)
    b_fc = jax.random.uniform(k[6], (1,), jnp.float32, -scale, scale)

    out = lstm_net_forward(x, w_ih, w_hh, b_ih, b_hh, w_fc, b_fc)
    out = jax.block_until_ready(out)

    ref = _reference(x, w_ih, w_hh, b_ih, b_hh, w_fc, b_fc)
    assert out.shape == (B,), out.shape
    assert jnp.allclose(out, ref, atol=2e-3, rtol=2e-3), (out, ref)

    print("KERNEL_OK")
</pallas_src>

<mosaic_0001>
module attributes {stable_mosaic.version = 11 : i64} {
  func.func @_lstm_kernel(%arg0: i32, %arg1: i32, %arg2: memref<8x8x16xf32, #tpu.memory_space<vmem>>, %arg3: memref<16x512xbf16, #tpu.memory_space<vmem>>, %arg4: memref<1x512xf32, #tpu.memory_space<vmem>>, %arg5: memref<128x512xbf16, #tpu.memory_space<vmem>>, %arg6: memref<1x128xf32, #tpu.memory_space<vmem>>, %arg7: memref<1x1xf32, #tpu.memory_space<vmem>>, %arg8: memref<8x1xf32, #tpu.memory_space<vmem>>, %arg9: memref<8x8x512xf32, #tpu.memory_space<vmem>>, %arg10: memref<8x128xbf16, #tpu.memory_space<vmem>>, %arg11: memref<8x128xf32, #tpu.memory_space<vmem>>) attributes {dimension_semantics = [#tpu.dimension_semantics<parallel>, #tpu.dimension_semantics<arbitrary>], iteration_bounds = array<i64: 1, 1>, scalar_prefetch = 0 : i64, scratch_operands = 3 : i64, tpu.core_type = #tpu.core_type<tc>, window_params = [{transform_indices = @transform_0, window_bounds = array<i64: 8, 8, 16>}, {pipeline_mode = #tpu.pipeline_mode<synchronous>, transform_indices = @transform_1, window_bounds = array<i64: 16, 512>}, {pipeline_mode = #tpu.pipeline_mode<synchronous>, transform_indices = @transform_2, window_bounds = array<i64: 1, 512>}, {pipeline_mode = #tpu.pipeline_mode<synchronous>, transform_indices = @transform_3, window_bounds = array<i64: 128, 512>}, {pipeline_mode = #tpu.pipeline_mode<synchronous>, transform_indices = @transform_4, window_bounds = array<i64: 1, 128>}, {pipeline_mode = #tpu.pipeline_mode<synchronous>, transform_indices = @transform_5, window_bounds = array<i64: 1, 1>}, {transform_indices = @transform_6, window_bounds = array<i64: 8, 1>}]} {
    %c0_i32 = arith.constant 0 : i32
    %0 = arith.cmpi eq, %arg1, %c0_i32 : i32
    %1 = arith.extui %0 : i1 to i32
    %c0_i32_0 = arith.constant 0 : i32
    %2 = arith.cmpi ne, %1, %c0_i32_0 : i32
    scf.if %2 {
      %cst_55 = arith.constant 0.000000e+00 : bf16
      %197 = vector.broadcast %cst_55 : bf16 to vector<8x128xbf16>
      %c0_56 = arith.constant 0 : index
      %c0_57 = arith.constant 0 : index
      %198 = vector.load %arg10[%c0_56, %c0_57] : memref<8x128xbf16, #tpu.memory_space<vmem>>, vector<8x128xbf16>
      tpu.vector_store %arg10[%c0_56, %c0_57], %197 {strides = array<i32>} : memref<8x128xbf16, #tpu.memory_space<vmem>>, vector<8x128xbf16>,
      %cst_58 = arith.constant 0.000000e+00 : f32
      %199 = vector.broadcast %cst_58 : f32 to vector<8x128xf32>
      %c0_59 = arith.constant 0 : index
      %c0_60 = arith.constant 0 : index
      %200 = vector.load %arg11[%c0_59, %c0_60] : memref<8x128xf32, #tpu.memory_space<vmem>>, vector<8x128xf32>
      tpu.vector_store %arg11[%c0_59, %c0_60], %199 {strides = array<i32>} : memref<8x128xf32, #tpu.memory_space<vmem>>, vector<8x128xf32>,
    } else {
    }
    %c0 = arith.constant 0 : index
    %c0_1 = arith.constant 0 : index
    %c0_2 = arith.constant 0 : index
    %3 = vector.load %arg2[%c0, %c0_1, %c0_2] : memref<8x8x16xf32, #tpu.memory_space<vmem>>, vector<8x8x16xf32>
    %4 = vector.shape_cast %3 : vector<8x8x16xf32> to vector<64x16xf32>
    %5 = arith.truncf %4 : vector<64x16xf32> to vector<64x16xbf16>
    %c0_3 = arith.constant 0 : index
    %c0_4 = arith.constant 0 : index
    %6 = vector.load %arg3[%c0_3, %c0_4] : memref<16x512xbf16, #tpu.memory_space<vmem>>, vector<16x512xbf16>
    %cst = arith.constant dense<0.000000e+00> : vector<64x512xf32>
    %7 = tpu.matmul %5, %6, %cst {dimension_numbers = #tpu.dot_dimension_numbers<[1], [0], [0], [1], [0, 0, 1, 1], [], []>} : vector<64x16xbf16>, vector<16x512xbf16>, vector<64x512xf32> -> vector<64x512xf32>
    %c0_5 = arith.constant 0 : index
    %c0_6 = arith.constant 0 : index
    %8 = vector.load %arg4[%c0_5, %c0_6] : memref<1x512xf32, #tpu.memory_space<vmem>>, vector<1x512xf32>
    %9 = vector.broadcast %8 : vector<1x512xf32> to vector<64x512xf32>
    %10 = arith.addf %7, %9 : vector<64x512xf32>
    %11 = vector.shape_cast %10 : vector<64x512xf32> to vector<8x8x512xf32>
    %c0_7 = arith.constant 0 : index
    %c0_8 = arith.constant 0 : index
    %c0_9 = arith.constant 0 : index
    %12 = vector.load %arg9[%c0_7, %c0_8, %c0_9] : memref<8x8x512xf32, #tpu.memory_space<vmem>>, vector<8x8x512xf32>
    tpu.vector_store %arg9[%c0_7, %c0_8, %c0_9], %11 {strides = array<i32>} : memref<8x8x512xf32, #tpu.memory_space<vmem>>, vector<8x8x512xf32>,
    %c0_10 = arith.constant 0 : index
    %c0_11 = arith.constant 0 : index
    %13 = vector.load %arg5[%c0_10, %c0_11] : memref<128x512xbf16, #tpu.memory_space<vmem>>, vector<128x512xbf16>
    %c0_12 = arith.constant 0 : index
    %c0_13 = arith.constant 0 : index
    %14 = vector.load %arg10[%c0_12, %c0_13] : memref<8x128xbf16, #tpu.memory_space<vmem>>, vector<8x128xbf16>
    %c0_14 = arith.constant 0 : index
    %c0_15 = arith.constant 0 : index
    %15 = vector.load %arg11[%c0_14, %c0_15] : memref<8x128xf32, #tpu.memory_space<vmem>>, vector<8x128xf32>
    %c0_i32_16 = arith.constant 0 : i32
    %16 = arith.index_cast %c0_i32_16 : i32 to index
    %c0_17 = arith.constant 0 : index
    %c0_18 = arith.constant 0 : index
    %17 = vector.load %arg9[%16, %c0_17, %c0_18] : memref<8x8x512xf32, #tpu.memory_space<vmem>>, vector<1x8x512xf32>
    %18 = vector.shape_cast %17 : vector<1x8x512xf32> to vector<8x512xf32>
    %cst_19 = arith.constant dense<0.000000e+00> : vector<8x512xf32>
    %19 = tpu.matmul %14, %13, %cst_19 {dimension_numbers = #tpu.dot_dimension_numbers<[1], [0], [0], [1], [0, 0, 1, 1], [], []>} : vector<8x128xbf16>, vector<128x512xbf16>, vector<8x512xf32> -> vector<8x512xf32>
    %20 = arith.addf %18, %19 : vector<8x512xf32>
    %21 = vector.extract_strided_slice %20 {offsets = [0, 0], sizes = [8, 384], strides = [1, 1]} : vector<8x512xf32> to vector<8x384xf32>
    %22 = arith.negf %21 : vector<8x384xf32>
    %23 = math.exp %22 : vector<8x384xf32>
    %cst_20 = arith.constant 1.000000e+00 : f32
    %24 = vector.broadcast %cst_20 : f32 to vector<8x384xf32>
    %25 = arith.addf %24, %23 : vector<8x384xf32>
    %26 = arith.divf %24, %25 : vector<8x384xf32>
    %27 = vector.extract_strided_slice %26 {offsets = [0, 0], sizes = [8, 128], strides = [1, 1]} : vector<8x384xf32> to vector<8x128xf32>
    %28 = vector.extract_strided_slice %26 {offsets = [0, 128], sizes = [8, 128], strides = [1, 1]} : vector<8x384xf32> to vector<8x128xf32>
    %29 = vector.extract_strided_slice %26 {offsets = [0, 256], sizes = [8, 128], strides = [1, 1]} : vector<8x384xf32> to vector<8x128xf32>
    %30 = vector.extract_strided_slice %20 {offsets = [0, 384], sizes = [8, 128], strides = [1, 1]} : vector<8x512xf32> to vector<8x128xf32>
    %31 = math.tanh %30 : vector<8x128xf32>
    %32 = arith.mulf %28, %15 : vector<8x128xf32>
    %33 = arith.mulf %27, %31 : vector<8x128xf32>
    %34 = arith.addf %32, %33 : vector<8x128xf32>
    %35 = math.tanh %34 : vector<8x128xf32>
    %36 = arith.mulf %29, %35 : vector<8x128xf32>
    %37 = arith.truncf %36 : vector<8x128xf32> to vector<8x128xbf16>
    %c1_i32 = arith.constant 1 : i32
    %38 = arith.index_cast %c1_i32 : i32 to index
    %c0_21 = arith.constant 0 : index
    %c0_22 = arith.constant 0 : index
    %39 = vector.load %arg9[%38, %c0_21, %c0_22] : memref<8x8x512xf32, #tpu.memory_space<vmem>>, vector<1x8x512xf32>
    %40 = vector.shape_cast %39 : vector<1x8x512xf32> to vector<8x512xf32>
    %cst_23 = arith.constant dense<0.000000e+00> : vector<8x512xf32>
    %41 = tpu.matmul %37, %13, %cst_23 {dimension_numbers = #tpu.dot_dimension_numbers<[1], [0], [0], [1], [0, 0, 1, 1], [], []>} : vector<8x128xbf16>, vector<128x512xbf16>, vector<8x512xf32> -> vector<8x512xf32>
    %42 = arith.addf %40, %41 : vector<8x512xf32>
    %43 = vector.extract_strided_slice %42 {offsets = [0, 0], sizes = [8, 384], strides = [1, 1]} : vector<8x512xf32> to vector<8x384xf32>
    %44 = arith.negf %43 : vector<8x384xf32>
    %45 = math.exp %44 : vector<8x384xf32>
    %cst_24 = arith.constant 1.000000e+00 : f32
    %46 = vector.broadcast %cst_24 : f32 to vector<8x384xf32>
    %47 = arith.addf %46, %45 : vector<8x384xf32>
    %48 = arith.divf %46, %47 : vector<8x384xf32>
    %49 = vector.extract_strided_slice %48 {offsets = [0, 0], sizes = [8, 128], strides = [1, 1]} : vector<8x384xf32> to vector<8x128xf32>
    %50 = vector.extract_strided_slice %48 {offsets = [0, 128], sizes = [8, 128], strides = [1, 1]} : vector<8x384xf32> to vector<8x128xf32>
    %51 = vector.extract_strided_slice %48 {offsets = [0, 256], sizes = [8, 128], strides = [1, 1]} : vector<8x384xf32> to vector<8x128xf32>
    %52 = vector.extract_strided_slice %42 {offsets = [0, 384], sizes = [8, 128], strides = [1, 1]} : vector<8x512xf32> to vector<8x128xf32>
    %53 = math.tanh %52 : vector<8x128xf32>
    %54 = arith.mulf %50, %34 : vector<8x128xf32>
    %55 = arith.mulf %49, %53 : vector<8x128xf32>
    %56 = arith.addf %54, %55 : vector<8x128xf32>
    %57 = math.tanh %56 : vector<8x128xf32>
    %58 = arith.mulf %51, %57 : vector<8x128xf32>
    %59 = arith.truncf %58 : vector<8x128xf32> to vector<8x128xbf16>
    %c2_i32 = arith.constant 2 : i32
    %60 = arith.index_cast %c2_i32 : i32 to index
    %c0_25 = arith.constant 0 : index
    %c0_26 = arith.constant 0 : index
    %61 = vector.load %arg9[%60, %c0_25, %c0_26] : memref<8x8x512xf32, #tpu.memory_space<vmem>>, vector<1x8x512xf32>
    %62 = vector.shape_cast %61 : vector<1x8x512xf32> to vector<8x512xf32>
    %cst_27 = arith.constant dense<0.000000e+00> : vector<8x512xf32>
    %63 = tpu.matmul %59, %13, %cst_27 {dimension_numbers = #tpu.dot_dimension_numbers<[1], [0], [0], [1], [0, 0, 1, 1], [], []>} : vector<8x128xbf16>, vector<128x512xbf16>, vector<8x512xf32> -> vector<8x512xf32>
    %64 = arith.addf %62, %63 : vector<8x512xf32>
    %65 = vector.extract_strided_slice %64 {offsets = [0, 0], sizes = [8, 384], strides = [1, 1]} : vector<8x512xf32> to vector<8x384xf32>
    %66 = arith.negf %65 : vector<8x384xf32>
    %67 = math.exp %66 : vector<8x384xf32>
    %cst_28 = arith.constant 1.000000e+00 : f32
    %68 = vector.broadcast %cst_28 : f32 to vector<8x384xf32>
    %69 = arith.addf %68, %67 : vector<8x384xf32>
    %70 = arith.divf %68, %69 : vector<8x384xf32>
    %71 = vector.extract_strided_slice %70 {offsets = [0, 0], sizes = [8, 128], strides = [1, 1]} : vector<8x384xf32> to vector<8x128xf32>
    %72 = vector.extract_strided_slice %70 {offsets = [0, 128], sizes = [8, 128], strides = [1, 1]} : vector<8x384xf32> to vector<8x128xf32>
    %73 = vector.extract_strided_slice %70 {offsets = [0, 256], sizes = [8, 128], strides = [1, 1]} : vector<8x384xf32> to vector<8x128xf32>
    %74 = vector.extract_strided_slice %64 {offsets = [0, 384], sizes = [8, 128], strides = [1, 1]} : vector<8x512xf32> to vector<8x128xf32>
    %75 = math.tanh %74 : vector<8x128xf32>
    %76 = arith.mulf %72, %56 : vector<8x128xf32>
    %77 = arith.mulf %71, %75 : vector<8x128xf32>
    %78 = arith.addf %76, %77 : vector<8x128xf32>
    %79 = math.tanh %78 : vector<8x128xf32>
    %80 = arith.mulf %73, %79 : vector<8x128xf32>
    %81 = arith.truncf %80 : vector<8x128xf32> to vector<8x128xbf16>
    %c3_i32 = arith.constant 3 : i32
    %82 = arith.index_cast %c3_i32 : i32 to index
    %c0_29 = arith.constant 0 : index
    %c0_30 = arith.constant 0 : index
    %83 = vector.load %arg9[%82, %c0_29, %c0_30] : memref<8x8x512xf32, #tpu.memory_space<vmem>>, vector<1x8x512xf32>
    %84 = vector.shape_cast %83 : vector<1x8x512xf32> to vector<8x512xf32>
    %cst_31 = arith.constant dense<0.000000e+00> : vector<8x512xf32>
    %85 = tpu.matmul %81, %13, %cst_31 {dimension_numbers = #tpu.dot_dimension_numbers<[1], [0], [0], [1], [0, 0, 1, 1], [], []>} : vector<8x128xbf16>, vector<128x512xbf16>, vector<8x512xf32> -> vector<8x512xf32>
    %86 = arith.addf %84, %85 : vector<8x512xf32>
    %87 = vector.extract_strided_slice %86 {offsets = [0, 0], sizes = [8, 384], strides = [1, 1]} : vector<8x512xf32> to vector<8x384xf32>
    %88 = arith.negf %87 : vector<8x384xf32>
    %89 = math.exp %88 : vector<8x384xf32>
    %cst_32 = arith.constant 1.000000e+00 : f32
    %90 = vector.broadcast %cst_32 : f32 to vector<8x384xf32>
    %91 = arith.addf %90, %89 : vector<8x384xf32>
    %92 = arith.divf %90, %91 : vector<8x384xf32>
    %93 = vector.extract_strided_slice %92 {offsets = [0, 0], sizes = [8, 128], strides = [1, 1]} : vector<8x384xf32> to vector<8x128xf32>
    %94 = vector.extract_strided_slice %92 {offsets = [0, 128], sizes = [8, 128], strides = [1, 1]} : vector<8x384xf32> to vector<8x128xf32>
    %95 = vector.extract_strided_slice %92 {offsets = [0, 256], sizes = [8, 128], strides = [1, 1]} : vector<8x384xf32> to vector<8x128xf32>
    %96 = vector.extract_strided_slice %86 {offsets = [0, 384], sizes = [8, 128], strides = [1, 1]} : vector<8x512xf32> to vector<8x128xf32>
    %97 = math.tanh %96 : vector<8x128xf32>
    %98 = arith.mulf %94, %78 : vector<8x128xf32>
    %99 = arith.mulf %93, %97 : vector<8x128xf32>
    %100 = arith.addf %98, %99 : vector<8x128xf32>
    %101 = math.tanh %100 : vector<8x128xf32>
    %102 = arith.mulf %95, %101 : vector<8x128xf32>
    %103 = arith.truncf %102 : vector<8x128xf32> to vector<8x128xbf16>
    %c4_i32 = arith.constant 4 : i32
    %104 = arith.index_cast %c4_i32 : i32 to index
    %c0_33 = arith.constant 0 : index
    %c0_34 = arith.constant 0 : index
    %105 = vector.load %arg9[%104, %c0_33, %c0_34] : memref<8x8x512xf32, #tpu.memory_space<vmem>>, vector<1x8x512xf32>
    %106 = vector.shape_cast %105 : vector<1x8x512xf32> to vector<8x512xf32>
    %cst_35 = arith.constant dense<0.000000e+00> : vector<8x512xf32>
    %107 = tpu.matmul %103, %13, %cst_35 {dimension_numbers = #tpu.dot_dimension_numbers<[1], [0], [0], [1], [0, 0, 1, 1], [], []>} : vector<8x128xbf16>, vector<128x512xbf16>, vector<8x512xf32> -> vector<8x512xf32>
    %108 = arith.addf %106, %107 : vector<8x512xf32>
    %109 = vector.extract_strided_slice %108 {offsets = [0, 0], sizes = [8, 384], strides = [1, 1]} : vector<8x512xf32> to vector<8x384xf32>
    %110 = arith.negf %109 : vector<8x384xf32>
    %111 = math.exp %110 : vector<8x384xf32>
    %cst_36 = arith.constant 1.000000e+00 : f32
    %112 = vector.broadcast %cst_36 : f32 to vector<8x384xf32>
    %113 = arith.addf %112, %111 : vector<8x384xf32>
    %114 = arith.divf %112, %113 : vector<8x384xf32>
    %115 = vector.extract_strided_slice %114 {offsets = [0, 0], sizes = [8, 128], strides = [1, 1]} : vector<8x384xf32> to vector<8x128xf32>
    %116 = vector.extract_strided_slice %114 {offsets = [0, 128], sizes = [8, 128], strides = [1, 1]} : vector<8x384xf32> to vector<8x128xf32>
    %117 = vector.extract_strided_slice %114 {offsets = [0, 256], sizes = [8, 128], strides = [1, 1]} : vector<8x384xf32> to vector<8x128xf32>
    %118 = vector.extract_strided_slice %108 {offsets = [0, 384], sizes = [8, 128], strides = [1, 1]} : vector<8x512xf32> to vector<8x128xf32>
    %119 = math.tanh %118 : vector<8x128xf32>
    %120 = arith.mulf %116, %100 : vector<8x128xf32>
    %121 = arith.mulf %115, %119 : vector<8x128xf32>
    %122 = arith.addf %120, %121 : vector<8x128xf32>
    %123 = math.tanh %122 : vector<8x128xf32>
    %124 = arith.mulf %117, %123 : vector<8x128xf32>
    %125 = arith.truncf %124 : vector<8x128xf32> to vector<8x128xbf16>
    %c5_i32 = arith.constant 5 : i32
    %126 = arith.index_cast %c5_i32 : i32 to index
    %c0_37 = arith.constant 0 : index
    %c0_38 = arith.constant 0 : index
    %127 = vector.load %arg9[%126, %c0_37, %c0_38] : memref<8x8x512xf32, #tpu.memory_space<vmem>>, vector<1x8x512xf32>
    %128 = vector.shape_cast %127 : vector<1x8x512xf32> to vector<8x512xf32>
    %cst_39 = arith.constant dense<0.000000e+00> : vector<8x512xf32>
    %129 = tpu.matmul %125, %13, %cst_39 {dimension_numbers = #tpu.dot_dimension_numbers<[1], [0], [0], [1], [0, 0, 1, 1], [], []>} : vector<8x128xbf16>, vector<128x512xbf16>, vector<8x512xf32> -> vector<8x512xf32>
    %130 = arith.addf %128, %129 : vector<8x512xf32>
    %131 = vector.extract_strided_slice %130 {offsets = [0, 0], sizes = [8, 384], strides = [1, 1]} : vector<8x512xf32> to vector<8x384xf32>
    %132 = arith.negf %131 : vector<8x384xf32>
    %133 = math.exp %132 : vector<8x384xf32>
    %cst_40 = arith.constant 1.000000e+00 : f32
    %134 = vector.broadcast %cst_40 : f32 to vector<8x384xf32>
    %135 = arith.addf %134, %133 : vector<8x384xf32>
    %136 = arith.divf %134, %135 : vector<8x384xf32>
    %137 = vector.extract_strided_slice %136 {offsets = [0, 0], sizes = [8, 128], strides = [1, 1]} : vector<8x384xf32> to vector<8x128xf32>
    %138 = vector.extract_strided_slice %136 {offsets = [0, 128], sizes = [8, 128], strides = [1, 1]} : vector<8x384xf32> to vector<8x128xf32>
    %139 = vector.extract_strided_slice %136 {offsets = [0, 256], sizes = [8, 128], strides = [1, 1]} : vector<8x384xf32> to vector<8x128xf32>
    %140 = vector.extract_strided_slice %130 {offsets = [0, 384], sizes = [8, 128], strides = [1, 1]} : vector<8x512xf32> to vector<8x128xf32>
    %141 = math.tanh %140 : vector<8x128xf32>
    %142 = arith.mulf %138, %122 : vector<8x128xf32>
    %143 = arith.mulf %137, %141 : vector<8x128xf32>
    %144 = arith.addf %142, %143 : vector<8x128xf32>
    %145 = math.tanh %144 : vector<8x128xf32>
    %146 = arith.mulf %139, %145 : vector<8x128xf32>
    %147 = arith.truncf %146 : vector<8x128xf32> to vector<8x128xbf16>
    %c6_i32 = arith.constant 6 : i32
    %148 = arith.index_cast %c6_i32 : i32 to index
    %c0_41 = arith.constant 0 : index
    %c0_42 = arith.constant 0 : index
    %149 = vector.load %arg9[%148, %c0_41, %c0_42] : memref<8x8x512xf32, #tpu.memory_space<vmem>>, vector<1x8x512xf32>
    %150 = vector.shape_cast %149 : vector<1x8x512xf32> to vector<8x512xf32>
    %cst_43 = arith.constant dense<0.000000e+00> : vector<8x512xf32>
    %151 = tpu.matmul %147, %13, %cst_43 {dimension_numbers = #tpu.dot_dimension_numbers<[1], [0], [0], [1], [0, 0, 1, 1], [], []>} : vector<8x128xbf16>, vector<128x512xbf16>, vector<8x512xf32> -> vector<8x512xf32>
    %152 = arith.addf %150, %151 : vector<8x512xf32>
    %153 = vector.extract_strided_slice %152 {offsets = [0, 0], sizes = [8, 384], strides = [1, 1]} : vector<8x512xf32> to vector<8x384xf32>
    %154 = arith.negf %153 : vector<8x384xf32>
    %155 = math.exp %154 : vector<8x384xf32>
    %cst_44 = arith.constant 1.000000e+00 : f32
    %156 = vector.broadcast %cst_44 : f32 to vector<8x384xf32>
    %157 = arith.addf %156, %155 : vector<8x384xf32>
    %158 = arith.divf %156, %157 : vector<8x384xf32>
    %159 = vector.extract_strided_slice %158 {offsets = [0, 0], sizes = [8, 128], strides = [1, 1]} : vector<8x384xf32> to vector<8x128xf32>
    %160 = vector.extract_strided_slice %158 {offsets = [0, 128], sizes = [8, 128], strides = [1, 1]} : vector<8x384xf32> to vector<8x128xf32>
    %161 = vector.extract_strided_slice %158 {offsets = [0, 256], sizes = [8, 128], strides = [1, 1]} : vector<8x384xf32> to vector<8x128xf32>
    %162 = vector.extract_strided_slice %152 {offsets = [0, 384], sizes = [8, 128], strides = [1, 1]} : vector<8x512xf32> to vector<8x128xf32>
    %163 = math.tanh %162 : vector<8x128xf32>
    %164 = arith.mulf %160, %144 : vector<8x128xf32>
    %165 = arith.mulf %159, %163 : vector<8x128xf32>
    %166 = arith.addf %164, %165 : vector<8x128xf32>
    %167 = math.tanh %166 : vector<8x128xf32>
    %168 = arith.mulf %161, %167 : vector<8x128xf32>
    %169 = arith.truncf %168 : vector<8x128xf32> to vector<8x128xbf16>
    %c7_i32 = arith.constant 7 : i32
    %170 = arith.index_cast %c7_i32 : i32 to index
    %c0_45 = arith.constant 0 : index
    %c0_46 = arith.constant 0 : index
    %171 = vector.load %arg9[%170, %c0_45, %c0_46] : memref<8x8x512xf32, #tpu.memory_space<vmem>>, vector<1x8x512xf32>
    %172 = vector.shape_cast %171 : vector<1x8x512xf32> to vector<8x512xf32>
    %cst_47 = arith.constant dense<0.000000e+00> : vector<8x512xf32>
    %173 = tpu.matmul %169, %13, %cst_47 {dimension_numbers = #tpu.dot_dimension_numbers<[1], [0], [0], [1], [0, 0, 1, 1], [], []>} : vector<8x128xbf16>, vector<128x512xbf16>, vector<8x512xf32> -> vector<8x512xf32>
    %174 = arith.addf %172, %173 : vector<8x512xf32>
    %175 = vector.extract_strided_slice %174 {offsets = [0, 0], sizes = [8, 384], strides = [1, 1]} : vector<8x512xf32> to vector<8x384xf32>
    %176 = arith.negf %175 : vector<8x384xf32>
    %177 = math.exp %176 : vector<8x384xf32>
    %cst_48 = arith.constant 1.000000e+00 : f32
    %178 = vector.broadcast %cst_48 : f32 to vector<8x384xf32>
    %179 = arith.addf %178, %177 : vector<8x384xf32>
    %180 = arith.divf %178, %179 : vector<8x384xf32>
    %181 = vector.extract_strided_slice %180 {offsets = [0, 0], sizes = [8, 128], strides = [1, 1]} : vector<8x384xf32> to vector<8x128xf32>
    %182 = vector.extract_strided_slice %180 {offsets = [0, 128], sizes = [8, 128], strides = [1, 1]} : vector<8x384xf32> to vector<8x128xf32>
    %183 = vector.extract_strided_slice %180 {offsets = [0, 256], sizes = [8, 128], strides = [1, 1]} : vector<8x384xf32> to vector<8x128xf32>
    %184 = vector.extract_strided_slice %174 {offsets = [0, 384], sizes = [8, 128], strides = [1, 1]} : vector<8x512xf32> to vector<8x128xf32>
    %185 = math.tanh %184 : vector<8x128xf32>
    %186 = arith.mulf %182, %166 : vector<8x128xf32>
    %187 = arith.mulf %181, %185 : vector<8x128xf32>
    %188 = arith.addf %186, %187 : vector<8x128xf32>
    %189 = math.tanh %188 : vector<8x128xf32>
    %190 = arith.mulf %183, %189 : vector<8x128xf32>
    %191 = arith.truncf %190 : vector<8x128xf32> to vector<8x128xbf16>
    %c8_i32 = arith.constant 8 : i32
    %c0_49 = arith.constant 0 : index
    %c0_50 = arith.constant 0 : index
    %192 = vector.load %arg10[%c0_49, %c0_50] : memref<8x128xbf16, #tpu.memory_space<vmem>>, vector<8x128xbf16>
    tpu.vector_store %arg10[%c0_49, %c0_50], %191 {strides = array<i32>} : memref<8x128xbf16, #tpu.memory_space<vmem>>, vector<8x128xbf16>,
    %c0_51 = arith.constant 0 : index
    %c0_52 = arith.constant 0 : index
    %193 = vector.load %arg11[%c0_51, %c0_52] : memref<8x128xf32, #tpu.memory_space<vmem>>, vector<8x128xf32>
    tpu.vector_store %arg11[%c0_51, %c0_52], %188 {strides = array<i32>} : memref<8x128xf32, #tpu.memory_space<vmem>>, vector<8x128xf32>,
    %c0_i32_53 = arith.constant 0 : i32
    %194 = arith.cmpi eq, %arg1, %c0_i32_53 : i32
    %195 = arith.extui %194 : i1 to i32
    %c0_i32_54 = arith.constant 0 : i32
    %196 = arith.cmpi ne, %195, %c0_i32_54 : i32
    scf.if %196 {
      %197 = arith.extf %191 : vector<8x128xbf16> to vector<8x128xf32>
      %c0_55 = arith.constant 0 : index
      %c0_56 = arith.constant 0 : index
      %198 = vector.load %arg6[%c0_55, %c0_56] : memref<1x128xf32, #tpu.memory_space<vmem>>, vector<1x128xf32>
      %199 = vector.broadcast %198 : vector<1x128xf32> to vector<8x128xf32>
      %200 = arith.mulf %197, %199 : vector<8x128xf32>
      %cst_57 = arith.constant dense<0.000000e+00> : vector<8xf32>
      %201 = vector.multi_reduction <add>, %200, %cst_57 [1] : vector<8x128xf32> to vector<8xf32>
      %202 = vector.shape_cast %201 : vector<8xf32> to vector<8x1xf32>
      %c0_58 = arith.constant 0 : index
      %c0_59 = arith.constant 0 : index
      %203 = vector.load %arg7[%c0_58, %c0_59] : memref<1x1xf32, #tpu.memory_space<vmem>>, vector<1x1xf32>
      %204 = vector.broadcast %203 : vector<1x1xf32> to vector<8x1xf32>
      %205 = arith.addf %202, %204 : vector<8x1xf32>
      %206 = arith.negf %205 : vector<8x1xf32>
      %207 = math.exp %206 : vector<8x1xf32>
      %cst_60 = arith.constant 1.000000e+00 : f32
      %208 = vector.broadcast %cst_60 : f32 to vector<8x1xf32>
      %209 = arith.addf %208, %207 : vector<8x1xf32>
      %210 = arith.divf %208, %209 : vector<8x1xf32>
      %c0_61 = arith.constant 0 : index
      %c0_62 = arith.constant 0 : index
      %211 = vector.load %arg8[%c0_61, %c0_62] : memref<8x1xf32, #tpu.memory_space<vmem>>, vector<8x1xf32>
      tpu.vector_store %arg8[%c0_61, %c0_62], %210 {strides = array<i32>} : memref<8x1xf32, #tpu.memory_space<vmem>>, vector<8x1xf32>,
    } else {
    }
    return
  }
  func.func @transform_0(%arg0: i32, %arg1: i32) -> (i32, i32, i32) {
    %c0_i32 = arith.constant 0 : i32
    %c0_i32_0 = arith.constant 0 : i32
    return %arg1, %arg0, %c0_i32 : i32, i32, i32
  }
  func.func @transform_1(%arg0: i32, %arg1: i32) -> (i32, i32) {
    %c0_i32 = arith.constant 0 : i32
    %c0_i32_0 = arith.constant 0 : i32
    %c0_i32_1 = arith.constant 0 : i32
    return %c0_i32, %c0_i32_0 : i32, i32
  }
  func.func @transform_2(%arg0: i32, %arg1: i32) -> (i32, i32) {
    %c0_i32 = arith.constant 0 : i32
    %c0_i32_0 = arith.constant 0 : i32
    %c0_i32_1 = arith.constant 0 : i32
    return %c0_i32, %c0_i32_0 : i32, i32
  }
  func.func @transform_3(%arg0: i32, %arg1: i32) -> (i32, i32) {
    %c0_i32 = arith.constant 0 : i32
    %c0_i32_0 = arith.constant 0 : i32
    %c0_i32_1 = arith.constant 0 : i32
    return %c0_i32, %c0_i32_0 : i32, i32
  }
  func.func @transform_4(%arg0: i32, %arg1: i32) -> (i32, i32) {
    %c0_i32 = arith.constant 0 : i32
    %c0_i32_0 = arith.constant 0 : i32
    %c0_i32_1 = arith.constant 0 : i32
    return %c0_i32, %c0_i32_0 : i32, i32
  }
  func.func @transform_5(%arg0: i32, %arg1: i32) -> (i32, i32) {
    %c0_i32 = arith.constant 0 : i32
    %c0_i32_0 = arith.constant 0 : i32
    %c0_i32_1 = arith.constant 0 : i32
    return %c0_i32, %c0_i32_0 : i32, i32
  }
  func.func @transform_6(%arg0: i32, %arg1: i32) -> (i32, i32) {
    %c0_i32 = arith.constant 0 : i32
    %c0_i32_0 = arith.constant 0 : i32
    return %arg0, %c0_i32 : i32, i32
  }
}

</mosaic_0001>

<llo_original>
// kernel: lstm_net_forward.1
$region0: #{lstm_net_forward.1}
  #allocation0 [shape = 'u32[]', space=smem, size = 0x4, offset = 0x4, fixed_abs, tag = 'smem constant byte address 0x4 - core index']
  #allocation1 [shape = 'u32[144,128]{1,0:T(1,128)}', space=vmem, size = 0x12000, scoped, tag = 'internal scratch']
  #allocation2 [shape = 'f32[8,8,512]{2,1,0:T(8,128)}', space=vmem, size = 0x20000, scoped, tag = 'scratch operand']
  #allocation3 [shape = 'bf16[8,128]{1,0:T(8,128)(2,1)}', space=vmem, size = 0x800, scoped, tag = 'scratch operand']
  #allocation4 [shape = 'f32[8,128]{1,0:T(8,128)}', space=vmem, size = 0x1000, scoped, tag = 'scratch operand']
  #allocation5 [shape = 'f32[1,1]{1,0:T(1,128)S(1)}', space=vmem, size = 0x200, scoped, tag = 'scoped memory for lstm_net_forward.1']
  %s0 = inlined_call_operand.hbm [shape: f32[8,8,16], index: 0, kind: input, shape index: {}]
  %s1 = inlined_call_operand.hbm [shape: bf16[16,512], index: 1, kind: input, shape index: {}]
  %s2 = inlined_call_operand.hbm [shape: f32[1,512], index: 2, kind: input, shape index: {}]
  %s3 = inlined_call_operand.hbm [shape: bf16[128,512], index: 3, kind: input, shape index: {}]
  %s4 = inlined_call_operand.hbm [shape: f32[1,128], index: 4, kind: input, shape index: {}]
  %s5 = inlined_call_operand.<no memory space> [shape: f32[1,1], index: 5, kind: input, shape index: {}]
  %s6 = inlined_call_operand.hbm [shape: f32[8,1], index: 6, kind: output, shape index: {}]
  %s7 = sld [smem:[#allocation0]]
  $region62: #{lstm_net_forward.1} parent=0
    _
  %s9 = ssub.s32 1, %s7
  %s10 = scalar_select 0, %s9, %s7
  %v11 = vstv %s5
  %12 = vst [vmem:[#allocation5] sm:$0x1] %v11
  $region1: #{lstm_net_forward.1} parent=0
    #allocation6 [shape = 'u8[32768]{0}', space=vmem, size = 0x8000, scoped, tag = 'input window, operand 0, single buffered']
    #allocation7 [shape = 's32[1]{0}', space=sflag, size = 0x4, scoped, tag = 'scoped memory for lstm_net_forward.1']
    #allocation8 [shape = 's32[1]{0}', space=sflag, size = 0x4, scoped, tag = 'scoped memory for lstm_net_forward.1']
    #allocation9 [shape = 'u8[16384]{0}', space=vmem, size = 0x4000, scoped, tag = 'input window, operand 1, single buffered']
    #allocation10 [shape = 's32[1]{0}', space=sflag, size = 0x4, scoped, tag = 'scoped memory for lstm_net_forward.1']
    #allocation11 [shape = 'u8[2048]{0}', space=vmem, size = 0x800, scoped, tag = 'input window, operand 2, single buffered']
    #allocation12 [shape = 'u8[131072]{0}', space=vmem, size = 0x20000, scoped, tag = 'input window, operand 3, single buffered']
    #allocation13 [shape = 's32[1]{0}', space=sflag, size = 0x4, scoped, tag = 'scoped memory for lstm_net_forward.1']
    #allocation14 [shape = 'u8[512]{0}', space=vmem, size = 0x400, scoped, tag = 'input window, operand 4, single buffered']
    #allocation15 [shape = 'u8[4096]{0}', space=vmem, size = 0x1000, scoped, tag = 'output window, operand 0, single buffered']
    %13 = vsyncpa [#allocation7], 0
    %14 = vsyncpa [#allocation10], 0
    %15 = vsyncpa [#allocation13], 0
    %16 = vsyncpa [#allocation8], 0
    // Predicated region
    $region2: #{lstm_net_forward.1} parent=1 // pred_check
      _
    $region3: #{lstm_net_forward.1} parent=1 // pred_check_branch
      %18 = sbr.rel (0) target = $region5
    $region4: #{lstm_net_forward.1} parent=1 // pred_region
      %s20 = ssub.s32 1024, 1024
      %21 = vsyncadd [#allocation7], %s20
      %s22 = sshll.u32 [#allocation6], 4
      %s23 = int_to_ptr.vmem [resolvable:$true] %s22
      %28 = dma.hbm_to_vmem [thread:$0]  %s0, 1024, %s23, [#allocation7], 128, 128, 8
    $region5: #{lstm_net_forward.1} parent=1 // pred_fallthru
      _
    // Predicated region
    $region6: #{lstm_net_forward.1} parent=1 // pred_check
      _
    $region7: #{lstm_net_forward.1} parent=1 // pred_check_branch
      %30 = sbr.rel (0) target = $region9
    $region8: #{lstm_net_forward.1} parent=1 // pred_region
      %s32 = ssub.s32 512, 512
      %33 = vsyncadd [#allocation10], %s32
      %s34 = sshll.u32 [#allocation9], 4
      %s35 = int_to_ptr.vmem [resolvable:$true] %s34
      %40 = dma.hbm_to_vmem [thread:$0]  %s1, 512, %s35, [#allocation10], 256, 256, 16
    $region9: #{lstm_net_forward.1} parent=1 // pred_fallthru
      _
    // Predicated region
    $region10: #{lstm_net_forward.1} parent=1 // pred_check
      _
    $region11: #{lstm_net_forward.1} parent=1 // pred_check_branch
      %42 = sbr.rel (0) target = $region13
    $region12: #{lstm_net_forward.1} parent=1 // pred_region
      %s44 = ssub.s32 64, 64
      %45 = vsyncadd [#allocation10], %s44
      %s47 = sshll.u32 [#allocation11], 4
      %s48 = int_to_ptr.vmem [resolvable:$true] %s47
      %50 = dma.hbm_to_vmem [thread:$0]  %s2, 64, %s48, [#allocation10]
    $region13: #{lstm_net_forward.1} parent=1 // pred_fallthru
      _
    // Predicated region
    $region14: #{lstm_net_forward.1} parent=1 // pred_check
      _
    $region15: #{lstm_net_forward.1} parent=1 // pred_check_branch
      %52 = sbr.rel (0) target = $region17
    $region16: #{lstm_net_forward.1} parent=1 // pred_region
      %s54 = ssub.s32 4096, 4096
      %55 = vsyncadd [#allocation13], %s54
      %s56 = sshll.u32 [#allocation12], 4
      %s57 = int_to_ptr.vmem [resolvable:$true] %s56
      %62 = dma.hbm_to_vmem [thread:$0]  %s3, 4096, %s57, [#allocation13], 256, 256, 16
    $region17: #{lstm_net_forward.1} parent=1 // pred_fallthru
      _
    // Predicated region
    $region18: #{lstm_net_forward.1} parent=1 // pred_check
      _
    $region19: #{lstm_net_forward.1} parent=1 // pred_check_branch
      %64 = sbr.rel (0) target = $region21
    $region20: #{lstm_net_forward.1} parent=1 // pred_region
      %s66 = ssub.s32 16, 16
      %67 = vsyncadd [#allocation13], %s66
      %s69 = sshll.u32 [#allocation14], 4
      %s70 = int_to_ptr.vmem [resolvable:$true] %s69
      %72 = dma.hbm_to_vmem [thread:$0]  %s4, 16, %s70, [#allocation13]
    $region21: #{lstm_net_forward.1} parent=1 // pred_fallthru
      _
    // Predicated region
    $region22: #{lstm_net_forward.1} parent=1 // pred_check
      _
    $region23: #{lstm_net_forward.1} parent=1 // pred_check_branch
      %74 = sbr.rel (0) target = $region25
    $region24: #{lstm_net_forward.1} parent=1 // pred_region
      _
    $region25: #{lstm_net_forward.1} parent=1 // pred_fallthru
      _
    // Predicated region
    $region26: #{lstm_net_forward.1} parent=1 // pred_check
      _
    $region27: #{lstm_net_forward.1} parent=1 // pred_check_branch
      %76 = sbr.rel (0) target = $region29
    $region28: #{lstm_net_forward.1} parent=1 // pred_region
      %77 = dma.done [#allocation7], 1024
    $region29: #{lstm_net_forward.1} parent=1 // pred_fallthru
      _
    // Predicated region
    $region30: #{lstm_net_forward.1} parent=1 // pred_check
      _
    $region31: #{lstm_net_forward.1} parent=1 // pred_check_branch
      %79 = sbr.rel (0) target = $region33
    $region32: #{lstm_net_forward.1} parent=1 // pred_region
      %80 = dma.done [#allocation10], 512
    $region33: #{lstm_net_forward.1} parent=1 // pred_fallthru
      _
    // Predicated region
    $region34: #{lstm_net_forward.1} parent=1 // pred_check
      _
    $region35: #{lstm_net_forward.1} parent=1 // pred_check_branch
      %82 = sbr.rel (0) target = $region37
    $region36: #{lstm_net_forward.1} parent=1 // pred_region
      %83 = dma.done [#allocation10], 64
    $region37: #{lstm_net_forward.1} parent=1 // pred_fallthru
      _
    // Predicated region
    $region38: #{lstm_net_forward.1} parent=1 // pred_check
      _
    $region39: #{lstm_net_forward.1} parent=1 // pred_check_branch
      %85 = sbr.rel (0) target = $region41
    $region40: #{lstm_net_forward.1} parent=1 // pred_region
      %86 = dma.done [#allocation13], 4096
    $region41: #{lstm_net_forward.1} parent=1 // pred_fallthru
      _
    // Predicated region
    $region42: #{lstm_net_forward.1} parent=1 // pred_check
      _
    $region43: #{lstm_net_forward.1} parent=1 // pred_check_branch
      %88 = sbr.rel (0) target = $region45
    $region44: #{lstm_net_forward.1} parent=1 // pred_region
      %89 = dma.done [#allocation13], 16
    $region45: #{lstm_net_forward.1} parent=1 // pred_fallthru
      _
    %p91 = scmp.eq.s32.totalorder 0, 0
    // Predicated region
    $region46: #{lstm_net_forward.1} parent=1 // pred_check
      %p92 = pneg %p91
    $region47: #{lstm_net_forward.1} parent=1 // pred_check_branch
      %94 = sbr.rel (%p92) target = $region49
    $region48: #{lstm_net_forward.1} parent=1 // pred_region
      %95 = vst [vmem:[#allocation3] sm:$0xf] 0
      %96 = vst [vmem:[#allocation4] sm:$0xff] 0.0
    $region49: #{lstm_net_forward.1} parent=1 // pred_fallthru
      _
    %v97 = vld [vmem:[#allocation6] sm:$0xff]
    %v98 = vld [vmem:[#allocation6 + $0x8] sm:$0xff]
    %v99 = vld [vmem:[#allocation6 + $0x10] sm:$0xff]
    %v100 = vld [vmem:[#allocation6 + $0x18] sm:$0xff]
    %v101 = vld [vmem:[#allocation6 + $0x20] sm:$0xff]
    %v102 = vld [vmem:[#allocation6 + $0x28] sm:$0xff]
    %v103 = vld [vmem:[#allocation6 + $0x30] sm:$0xff]
    %v104 = vld [vmem:[#allocation6 + $0x38] sm:$0xff]
    %v105 = vpack.c.bf16 %v98, %v97
    %v106 = vpack.c.bf16 %v100, %v99
    %v107 = vpack.c.bf16 %v102, %v101
    %v108 = vpack.c.bf16 %v104, %v103
    %v109 = vld [vmem:[#allocation9] sm:$0xff]
    %v110 = vld [vmem:[#allocation9 + $0x8] sm:$0xff]
    %v111 = vld [vmem:[#allocation9 + $0x10] sm:$0xff]
    %v112 = vld [vmem:[#allocation9 + $0x18] sm:$0xff]
    %v113 = vld [vmem:[#allocation11] sm:$0xf]
    %v115 = vlaneseq
    %v116 = vshrl.u32 %v115, 7
    %v117 = vsub.s32 0, %v116
    %v118 = vrot.slane %v113, %v117
    %v119 = vlaneseq
    %v120 = vshrl.u32 %v119, 7
    %v121 = vsub.s32 1, %v120
    %v122 = vrot.slane %v113, %v121
    %v123 = vlaneseq
    %v124 = vshrl.u32 %v123, 7
    %v125 = vsub.s32 2, %v124
    %v126 = vrot.slane %v113, %v125
    %v127 = vlaneseq
    %v128 = vshrl.u32 %v127, 7
    %v129 = vsub.s32 3, %v128
    %v130 = vrot.slane %v113, %v129
    %v139 = vunpack.c.l.b16 %v109
    %v140 = vunpack.c.h.b16 %v109
    %v141 = vunpack.c.l.b16 %v110
    %v142 = vunpack.c.h.b16 %v110
    %v143 = vunpack.c.l.b16 %v111
    %v144 = vunpack.c.h.b16 %v111
    %v145 = vunpack.c.l.b16 %v112
    %v146 = vunpack.c.h.b16 %v112
    %v147 = vpack.c.b16 %v143, %v139
    %v148 = vpack.c.b16 %v144, %v140
    %v149 = vpack.c.b16 %v145, %v141
    %v150 = vpack.c.b16 %v146, %v142
    %vm155 = vcmask 130048
    %v157 = vsel %vm155, %v105, 0
    %v160 = vsel %vm155, %v106, 0
    %v163 = vsel %vm155, %v107, 0
    %v166 = vsel %vm155, %v108, 0
    %168 = vmatprep.subr.bf16.mxu0 %v148
    %169 = vmatpush1.bf16.msra.mxu0 %v147
    %170 = vmatprep.subr.bf16.mxu0 0
    %171 = vmatpush1.bf16.msra.mxu0 0
    %172 = vmatprep.subr.bf16.mxu0 0
    %173 = vmatpush1.bf16.msra.mxu0 0
    %174 = vmatprep.subr.bf16.mxu0 0
    %175 = vmatpush1.bf16.msra.mxu0 0
    %176 = vmatprep.subr.bf16.mxu0 0
    %177 = vmatpush1.bf16.msra.mxu0 0
    %178 = vmatprep.subr.bf16.mxu0 0
    %179 = vmatpush1.bf16.msra.mxu0 0
    %180 = vmatprep.subr.bf16.mxu0 0
    %181 = vmatpush1.bf16.msra.mxu0 0
    %182 = vmatprep.subr.bf16.mxu0 0
    %183 = vmatpush1.bf16.msra.mxu0 0
    %184 = vmatprep.subr.bf16.mxu0 0
    %185 = vmatpush1.bf16.msra.mxu0 0
    %186 = vmatprep.subr.bf16.mxu0 0
    %187 = vmatpush1.bf16.msra.mxu0 0
    %188 = vmatprep.subr.bf16.mxu0 0
    %189 = vmatpush1.bf16.msra.mxu0 0
    %190 = vmatprep.subr.bf16.mxu0 0
    %191 = vmatpush1.bf16.msra.mxu0 0
    %192 = vmatprep.subr.bf16.mxu0 0
    %193 = vmatpush1.bf16.msra.mxu0 0
    %194 = vmatprep.subr.bf16.mxu0 0
    %195 = vmatpush1.bf16.msra.mxu0 0
    %196 = vmatprep.subr.bf16.mxu0 0
    %197 = vmatpush1.bf16.msra.mxu0 0
    %198 = vmatprep.subr.bf16.mxu0 0
    %199 = vmatpush1.bf16.msra.mxu0 0
    %200 = vmatprep.mubr.bf16.mxu0 0
    %201 = vmatmul.mubr.bf16.gmra.mrb[0].mxu0 %v157
    %v202 = vpop.f32.mrb[0].mxu0
    %v203 = vadd.f32 %v118, %v202
    %v204 = vpop.f32.mrb[0].mxu0
    %v205 = vadd.f32 %v122, %v204
    %v206 = vpop.f32.mrb[0].mxu0
    %v207 = vadd.f32 %v118, %v206
    %v208 = vpop.f32.mrb[0].mxu0
    %v209 = vadd.f32 %v122, %v208
    %210 = vmatprep.mubr.bf16.mxu0 0
    %211 = vmatmul.mubr.bf16.gmra.mrb[0].mxu0 %v160
    %v212 = vpop.f32.mrb[0].mxu0
    %v213 = vadd.f32 %v118, %v212
    %v214 = vpop.f32.mrb[0].mxu0
    %v215 = vadd.f32 %v122, %v214
    %v216 = vpop.f32.mrb[0].mxu0
    %v217 = vadd.f32 %v118, %v216
    %v218 = vpop.f32.mrb[0].mxu0
    %v219 = vadd.f32 %v122, %v218
    %220 = vmatprep.mubr.bf16.mxu0 0
    %221 = vmatmul.mubr.bf16.gmra.mrb[0].mxu0 %v163
    %v222 = vpop.f32.mrb[0].mxu0
    %v223 = vadd.f32 %v118, %v222
    %v224 = vpop.f32.mrb[0].mxu0
    %v225 = vadd.f32 %v122, %v224
    %v226 = vpop.f32.mrb[0].mxu0
    %v227 = vadd.f32 %v118, %v226
    %v228 = vpop.f32.mrb[0].mxu0
    %v229 = vadd.f32 %v122, %v228
    %230 = vmatprep.mubr.bf16.mxu0 0
    %231 = vmatmul.mubr.bf16.gmra.mrb[0].mxu0 %v166
    %v232 = vpop.f32.mrb[0].mxu0
    %v233 = vadd.f32 %v118, %v232
    %v234 = vpop.f32.mrb[0].mxu0
    %v235 = vadd.f32 %v122, %v234
    %v236 = vpop.f32.mrb[0].mxu0
    %v237 = vadd.f32 %v118, %v236
    %v238 = vpop.f32.mrb[0].mxu0
    %v239 = vadd.f32 %v122, %v238
    %240 = vdwg.mxu0
    %241 = vmatprep.subr.bf16.mxu0 %v150
    %242 = vmatpush1.bf16.msra.mxu0 %v149
    %243 = vmatprep.subr.bf16.mxu0 0
    %244 = vmatpush1.bf16.msra.mxu0 0
    %245 = vmatprep.subr.bf16.mxu0 0
    %246 = vmatpush1.bf16.msra.mxu0 0
    %247 = vmatprep.subr.bf16.mxu0 0
    %248 = vmatpush1.bf16.msra.mxu0 0
    %249 = vmatprep.subr.bf16.mxu0 0
    %250 = vmatpush1.bf16.msra.mxu0 0
    %251 = vmatprep.subr.bf16.mxu0 0
    %252 = vmatpush1.bf16.msra.mxu0 0
    %253 = vmatprep.subr.bf16.mxu0 0
    %254 = vmatpush1.bf16.msra.mxu0 0
    %255 = vmatprep.subr.bf16.mxu0 0
    %256 = vmatpush1.bf16.msra.mxu0 0
    %257 = vmatprep.subr.bf16.mxu0 0
    %258 = vmatpush1.bf16.msra.mxu0 0
    %259 = vmatprep.subr.bf16.mxu0 0
    %260 = vmatpush1.bf16.msra.mxu0 0
    %261 = vmatprep.subr.bf16.mxu0 0
    %262 = vmatpush1.bf16.msra.mxu0 0
    %263 = vmatprep.subr.bf16.mxu0 0
    %264 = vmatpush1.bf16.msra.mxu0 0
    %265 = vmatprep.subr.bf16.mxu0 0
    %266 = vmatpush1.bf16.msra.mxu0 0
    %267 = vmatprep.subr.bf16.mxu0 0
    %268 = vmatpush1.bf16.msra.mxu0 0
    %269 = vmatprep.subr.bf16.mxu0 0
    %270 = vmatpush1.bf16.msra.mxu0 0
    %271 = vmatprep.subr.bf16.mxu0 0
    %272 = vmatpush1.bf16.msra.mxu0 0
    %273 = vmatprep.mubr.bf16.mxu0 0
    %274 = vmatmul.mubr.bf16.gmra.mrb[0].mxu0 %v157
    %v275 = vpop.f32.mrb[0].mxu0
    %v276 = vadd.f32 %v126, %v275
    %v277 = vpop.f32.mrb[0].mxu0
    %v278 = vadd.f32 %v130, %v277
    %v279 = vpop.f32.mrb[0].mxu0
    %v280 = vadd.f32 %v126, %v279
    %v281 = vpop.f32.mrb[0].mxu0
    %v282 = vadd.f32 %v130, %v281
    %283 = vmatprep.mubr.bf16.mxu0 0
    %284 = vmatmul.mubr.bf16.gmra.mrb[0].mxu0 %v160
    %v285 = vpop.f32.mrb[0].mxu0
    %v286 = vadd.f32 %v126, %v285
    %v287 = vpop.f32.mrb[0].mxu0
    %v288 = vadd.f32 %v130, %v287
    %v289 = vpop.f32.mrb[0].mxu0
    %v290 = vadd.f32 %v126, %v289
    %v291 = vpop.f32.mrb[0].mxu0
    %v292 = vadd.f32 %v130, %v291
    %293 = vmatprep.mubr.bf16.mxu0 0
    %294 = vmatmul.mubr.bf16.gmra.mrb[0].mxu0 %v163
    %v295 = vpop.f32.mrb[0].mxu0
    %v296 = vadd.f32 %v126, %v295
    %v297 = vpop.f32.mrb[0].mxu0
    %v298 = vadd.f32 %v130, %v297
    %v299 = vpop.f32.mrb[0].mxu0
    %v300 = vadd.f32 %v126, %v299
    %v301 = vpop.f32.mrb[0].mxu0
    %v302 = vadd.f32 %v130, %v301
    %303 = vmatprep.mubr.bf16.mxu0 0
    %304 = vmatmul.mubr.bf16.gmra.mrb[0].mxu0 %v166
    %v305 = vpop.f32.mrb[0].mxu0
    %v306 = vadd.f32 %v126, %v305
    %v307 = vpop.f32.mrb[0].mxu0
    %v308 = vadd.f32 %v130, %v307
    %v309 = vpop.f32.mrb[0].mxu0
    %v310 = vadd.f32 %v126, %v309
    %v311 = vpop.f32.mrb[0].mxu0
    %v312 = vadd.f32 %v130, %v311
    %313 = vdwg.mxu0
    %314 = vst [vmem:[#allocation2] sm:$0xff] %v203
    %315 = vst [vmem:[#allocation2 + $0x8] sm:$0xff] %v205
    %316 = vst [vmem:[#allocation2 + $0x10] sm:$0xff] %v276
    %317 = vst [vmem:[#allocation2 + $0x18] sm:$0xff] %v278
    %318 = vst [vmem:[#allocation2 + $0x20] sm:$0xff] %v207
    %319 = vst [vmem:[#allocation2 + $0x28] sm:$0xff] %v209
    %320 = vst [vmem:[#allocation2 + $0x30] sm:$0xff] %v280
    %321 = vst [vmem:[#allocation2 + $0x38] sm:$0xff] %v282
    %322 = vst [vmem:[#allocation2 + $0x40] sm:$0xff] %v213
    %323 = vst [vmem:[#allocation2 + $0x48] sm:$0xff] %v215
    %324 = vst [vmem:[#allocation2 + $0x50] sm:$0xff] %v286
    %325 = vst [vmem:[#allocation2 + $0x58] sm:$0xff] %v288
    %326 = vst [vmem:[#allocation2 + $0x60] sm:$0xff] %v217
    %327 = vst [vmem:[#allocation2 + $0x68] sm:$0xff] %v219
    %328 = vst [vmem:[#allocation2 + $0x70] sm:$0xff] %v290
    %329 = vst [vmem:[#allocation2 + $0x78] sm:$0xff] %v292
    %330 = vst [vmem:[#allocation2 + $0x80] sm:$0xff] %v223
    %331 = vst [vmem:[#allocation2 + $0x88] sm:$0xff] %v225
    %332 = vst [vmem:[#allocation2 + $0x90] sm:$0xff] %v296
    %333 = vst [vmem:[#allocation2 + $0x98] sm:$0xff] %v298
    %334 = vst [vmem:[#allocation2 + $0xa0] sm:$0xff] %v227
    %335 = vst [vmem:[#allocation2 + $0xa8] sm:$0xff] %v229
    %336 = vst [vmem:[#allocation2 + $0xb0] sm:$0xff] %v300
    %337 = vst [vmem:[#allocation2 + $0xb8] sm:$0xff] %v302
    %338 = vst [vmem:[#allocation2 + $0xc0] sm:$0xff] %v233
    %339 = vst [vmem:[#allocation2 + $0xc8] sm:$0xff] %v235
    %340 = vst [vmem:[#allocation2 + $0xd0] sm:$0xff] %v306
    %341 = vst [vmem:[#allocation2 + $0xd8] sm:$0xff] %v308
    %342 = vst [vmem:[#allocation2 + $0xe0] sm:$0xff] %v237
    %343 = vst [vmem:[#allocation2 + $0xe8] sm:$0xff] %v239
    %344 = vst [vmem:[#allocation2 + $0xf0] sm:$0xff] %v310
    %345 = vst [vmem:[#allocation2 + $0xf8] sm:$0xff] %v312
    %v346 = vld [vmem:[#allocation12] sm:$0xff]
    %v347 = vld [vmem:[#allocation12 + $0x8] sm:$0xff]
    %v348 = vld [vmem:[#allocation12 + $0x10] sm:$0xff]
    %v349 = vld [vmem:[#allocation12 + $0x18] sm:$0xff]
    %v350 = vld [vmem:[#allocation12 + $0x20] sm:$0xff]
    %v351 = vld [vmem:[#allocation12 + $0x28] sm:$0xff]
    %v352 = vld [vmem:[#allocation12 + $0x30] sm:$0xff]
    %v353 = vld [vmem:[#allocation12 + $0x38] sm:$0xff]
    %v354 = vld [vmem:[#allocation12 + $0x40] sm:$0xff]
    %v355 = vld [vmem:[#allocation12 + $0x48] sm:$0xff]
    %v356 = vld [vmem:[#allocation12 + $0x50] sm:$0xff]
    %v357 = vld [vmem:[#allocation12 + $0x58] sm:$0xff]
    %v358 = vld [vmem:[#allocation12 + $0x60] sm:$0xff]
    %v359 = vld [vmem:[#allocation12 + $0x68] sm:$0xff]
    %v360 = vld [vmem:[#allocation12 + $0x70] sm:$0xff]
    %v361 = vld [vmem:[#allocation12 + $0x78] sm:$0xff]
    %v362 = vld [vmem:[#allocation12 + $0x80] sm:$0xff]
    %v363 = vld [vmem:[#allocation12 + $0x88] sm:$0xff]
    %v364 = vld [vmem:[#allocation12 + $0x90] sm:$0xff]
    %v365 = vld [vmem:[#allocation12 + $0x98] sm:$0xff]
    %v366 = vld [vmem:[#allocation12 + $0xa0] sm:$0xff]
    %v367 = vld [vmem:[#allocation12 + $0xa8] sm:$0xff]
    %v368 = vld [vmem:[#allocation12 + $0xb0] sm:$0xff]
    %v369 = vld [vmem:[#allocation12 + $0xb8] sm:$0xff]
    %v370 = vld [vmem:[#allocation12 + $0xc0] sm:$0xff]
    %v371 = vld [vmem:[#allocation12 + $0xc8] sm:$0xff]
    %v372 = vld [vmem:[#allocation12 + $0xd0] sm:$0xff]
    %v373 = vld [vmem:[#allocation12 + $0xd8] sm:$0xff]
    %v374 = vld [vmem:[#allocation12 + $0xe0] sm:$0xff]
    %v375 = vld [vmem:[#allocation12 + $0xe8] sm:$0xff]
    %v376 = vld [vmem:[#allocation12 + $0xf0] sm:$0xff]
    %v377 = vld [vmem:[#allocation12 + $0xf8] sm:$0xff]
    %v378 = vld [vmem:[#allocation3] sm:$0xf]
    %v379 = vld [vmem:[#allocation4] sm:$0xff]
    %v380 = vld [vmem:[#allocation2] sm:$0xff]
    %v381 = vld [vmem:[#allocation2 + $0x8] sm:$0xff]
    %v382 = vld [vmem:[#allocation2 + $0x10] sm:$0xff]
    %v383 = vld [vmem:[#allocation2 + $0x18] sm:$0xff]
    %v416 = vunpack.c.l.b16 %v346
    %v417 = vunpack.c.h.b16 %v346
    %v418 = vunpack.c.l.b16 %v347
    %v419 = vunpack.c.h.b16 %v347
    %v420 = vunpack.c.l.b16 %v348
    %v421 = vunpack.c.h.b16 %v348
    %v422 = vunpack.c.l.b16 %v349
    %v423 = vunpack.c.h.b16 %v349
    %v424 = vunpack.c.l.b16 %v350
    %v425 = vunpack.c.h.b16 %v350
    %v426 = vunpack.c.l.b16 %v351
    %v427 = vunpack.c.h.b16 %v351
    %v428 = vunpack.c.l.b16 %v352
    %v429 = vunpack.c.h.b16 %v352
    %v430 = vunpack.c.l.b16 %v353
    %v431 = vunpack.c.h.b16 %v353
    %v432 = vunpack.c.l.b16 %v354
    %v433 = vunpack.c.h.b16 %v354
    %v434 = vunpack.c.l.b16 %v355
    %v435 = vunpack.c.h.b16 %v355
    %v436 = vunpack.c.l.b16 %v356
    %v437 = vunpack.c.h.b16 %v356
    %v438 = vunpack.c.l.b16 %v357
    %v439 = vunpack.c.h.b16 %v357
    %v440 = vunpack.c.l.b16 %v358
    %v441 = vunpack.c.h.b16 %v358
    %v442 = vunpack.c.l.b16 %v359
    %v443 = vunpack.c.h.b16 %v359
    %v444 = vunpack.c.l.b16 %v360
    %v445 = vunpack.c.h.b16 %v360
    %v446 = vunpack.c.l.b16 %v361
    %v447 = vunpack.c.h.b16 %v361
    %v448 = vunpack.c.l.b16 %v362
    %v449 = vunpack.c.h.b16 %v362
    %v450 = vunpack.c.l.b16 %v363
    %v451 = vunpack.c.h.b16 %v363
    %v452 = vunpack.c.l.b16 %v364
    %v453 = vunpack.c.h.b16 %v364
    %v454 = vunpack.c.l.b16 %v365
    %v455 = vunpack.c.h.b16 %v365
    %v456 = vunpack.c.l.b16 %v366
    %v457 = vunpack.c.h.b16 %v366
    %v458 = vunpack.c.l.b16 %v367
    %v459 = vunpack.c.h.b16 %v367
    %v460 = vunpack.c.l.b16 %v368
    %v461 = vunpack.c.h.b16 %v368
    %v462 = vunpack.c.l.b16 %v369
    %v463 = vunpack.c.h.b16 %v369
    %v464 = vunpack.c.l.b16 %v370
    %v465 = vunpack.c.h.b16 %v370
    %v466 = vunpack.c.l.b16 %v371
    %v467 = vunpack.c.h.b16 %v371
    %v468 = vunpack.c.l.b16 %v372
    %v469 = vunpack.c.h.b16 %v372
    %v470 = vunpack.c.l.b16 %v373
    %v471 = vunpack.c.h.b16 %v373
    %v472 = vunpack.c.l.b16 %v374
    %v473 = vunpack.c.h.b16 %v374
    %v474 = vunpack.c.l.b16 %v375
    %v475 = vunpack.c.h.b16 %v375
    %v476 = vunpack.c.l.b16 %v376
    %v477 = vunpack.c.h.b16 %v376
    %v478 = vunpack.c.l.b16 %v377
    %v479 = vunpack.c.h.b16 %v377
    %v480 = vpack.c.b16 %v420, %v416
    %v481 = vpack.c.b16 %v421, %v417
    %v482 = vpack.c.b16 %v422, %v418
    %v483 = vpack.c.b16 %v423, %v419
    %v484 = vpack.c.b16 %v428, %v424
    %v485 = vpack.c.b16 %v429, %v425
    %v486 = vpack.c.b16 %v430, %v426
    %v487 = vpack.c.b16 %v431, %v427
    %v488 = vpack.c.b16 %v436, %v432
    %v489 = vpack.c.b16 %v437, %v433
    %v490 = vpack.c.b16 %v438, %v434
    %v491 = vpack.c.b16 %v439, %v435
    %v492 = vpack.c.b16 %v444, %v440
    %v493 = vpack.c.b16 %v445, %v441
    %v494 = vpack.c.b16 %v446, %v442
    %v495 = vpack.c.b16 %v447, %v443
    %v496 = vpack.c.b16 %v452, %v448
    %v497 = vpack.c.b16 %v453, %v449
    %v498 = vpack.c.b16 %v454, %v450
    %v499 = vpack.c.b16 %v455, %v451
    %v500 = vpack.c.b16 %v460, %v456
    %v501 = vpack.c.b16 %v461, %v457
    %v502 = vpack.c.b16 %v462, %v458
    %v503 = vpack.c.b16 %v463, %v459
    %v504 = vpack.c.b16 %v468, %v464
    %v505 = vpack.c.b16 %v469, %v465
    %v506 = vpack.c.b16 %v470, %v466
    %v507 = vpack.c.b16 %v471, %v467
    %v508 = vpack.c.b16 %v476, %v472
    %v509 = vpack.c.b16 %v477, %v473
    %v510 = vpack.c.b16 %v478, %v474
    %v511 = vpack.c.b16 %v479, %v475
    %544 = vmatprep.subr.bf16.mxu0 %v481
    %545 = vmatpush1.bf16.msra.mxu0 %v480
    %546 = vmatprep.subr.bf16.mxu0 %v485
    %547 = vmatpush1.bf16.msra.mxu0 %v484
    %548 = vmatprep.subr.bf16.mxu0 %v489
    %549 = vmatpush1.bf16.msra.mxu0 %v488
    %550 = vmatprep.subr.bf16.mxu0 %v493
    %551 = vmatpush1.bf16.msra.mxu0 %v492
    %552 = vmatprep.subr.bf16.mxu0 %v497
    %553 = vmatpush1.bf16.msra.mxu0 %v496
    %554 = vmatprep.subr.bf16.mxu0 %v501
    %555 = vmatpush1.bf16.msra.mxu0 %v500
    %556 = vmatprep.subr.bf16.mxu0 %v505
    %557 = vmatpush1.bf16.msra.mxu0 %v504
    %558 = vmatprep.subr.bf16.mxu0 %v509
    %559 = vmatpush1.bf16.msra.mxu0 %v508
    %560 = vmatprep.subr.bf16.mxu0 0
    %561 = vmatpush1.bf16.msra.mxu0 0
    %562 = vmatprep.subr.bf16.mxu0 0
    %563 = vmatpush1.bf16.msra.mxu0 0
    %564 = vmatprep.subr.bf16.mxu0 0
    %565 = vmatpush1.bf16.msra.mxu0 0
    %566 = vmatprep.subr.bf16.mxu0 0
    %567 = vmatpush1.bf16.msra.mxu0 0
    %568 = vmatprep.subr.bf16.mxu0 0
    %569 = vmatpush1.bf16.msra.mxu0 0
    %570 = vmatprep.subr.bf16.mxu0 0
    %571 = vmatpush1.bf16.msra.mxu0 0
    %572 = vmatprep.subr.bf16.mxu0 0
    %573 = vmatpush1.bf16.msra.mxu0 0
    %574 = vmatprep.subr.bf16.mxu0 0
    %575 = vmatpush1.bf16.msra.mxu0 0
    %576 = vmatprep.mubr.bf16.mxu0 0
    %577 = vmatmul.mubr.bf16.gmra.mrb[0].mxu0 %v378
    %v578 = vpop.f32.mrb[0].mxu0
    %v579 = vadd.f32 0.0, %v578
    %v580 = vpop.f32.mrb[0].mxu0
    %v581 = vadd.f32 0.0, %v580
    %v582 = vpop.f32.mrb[0].mxu0
    %v583 = vpop.f32.mrb[0].mxu0
    %584 = vdwg.mxu0
    %585 = vmatprep.subr.bf16.mxu0 %v483
    %586 = vmatpush1.bf16.msra.mxu0 %v482
    %587 = vmatprep.subr.bf16.mxu0 %v487
    %588 = vmatpush1.bf16.msra.mxu0 %v486
    %589 = vmatprep.subr.bf16.mxu0 %v491
    %590 = vmatpush1.bf16.msra.mxu0 %v490
    %591 = vmatprep.subr.bf16.mxu0 %v495
    %592 = vmatpush1.bf16.msra.mxu0 %v494
    %593 = vmatprep.subr.bf16.mxu0 %v499
    %594 = vmatpush1.bf16.msra.mxu0 %v498
    %595 = vmatprep.subr.bf16.mxu0 %v503
    %596 = vmatpush1.bf16.msra.mxu0 %v502
    %597 = vmatprep.subr.bf16.mxu0 %v507
    %598 = vmatpush1.bf16.msra.mxu0 %v506
    %599 = vmatprep.subr.bf16.mxu0 %v511
    %600 = vmatpush1.bf16.msra.mxu0 %v510
    %601 = vmatprep.subr.bf16.mxu0 0
    %602 = vmatpush1.bf16.msra.mxu0 0
    %603 = vmatprep.subr.bf16.mxu0 0
    %604 = vmatpush1.bf16.msra.mxu0 0
    %605 = vmatprep.subr.bf16.mxu0 0
    %606 = vmatpush1.bf16.msra.mxu0 0
    %607 = vmatprep.subr.bf16.mxu0 0
    %608 = vmatpush1.bf16.msra.mxu0 0
    %609 = vmatprep.subr.bf16.mxu0 0
    %610 = vmatpush1.bf16.msra.mxu0 0
    %611 = vmatprep.subr.bf16.mxu0 0
    %612 = vmatpush1.bf16.msra.mxu0 0
    %613 = vmatprep.subr.bf16.mxu0 0
    %614 = vmatpush1.bf16.msra.mxu0 0
    %615 = vmatprep.subr.bf16.mxu0 0
    %616 = vmatpush1.bf16.msra.mxu0 0
    %617 = vmatprep.mubr.bf16.mxu0 0
    %618 = vmatmul.mubr.bf16.gmra.mrb[0].mxu0 %v378
    %v619 = vpop.f32.mrb[0].mxu0
    %v620 = vadd.f32 0.0, %v619
    %v621 = vpop.f32.mrb[0].mxu0
    %v622 = vadd.f32 0.0, %v621
    %v623 = vpop.f32.mrb[0].mxu0
    %v624 = vpop.f32.mrb[0].mxu0
    %625 = vdwg.mxu0
    %v626 = vadd.f32 %v380, %v579
    %v627 = vadd.f32 %v381, %v581
    %v628 = vadd.f32 %v382, %v620
    %v629 = vadd.f32 %v383, %v622
    %v630 = vxor.u32 %v626, 2147483648
    %v631 = vxor.u32 %v627, 2147483648
    %v632 = vxor.u32 %v628, 2147483648
    %v633 = vmul.f32 %v630, 1.442695
    %v634 = vpow.pop %v633
    %v635 = vmul.f32 %v631, 1.442695
    %v636 = vpow.pop %v635
    %v637 = vmul.f32 %v632, 1.442695
    %v638 = vpow.pop %v637
    %v639 = vadd.f32 %v634, 1.0
    %v640 = vadd.f32 %v636, 1.0
    %v641 = vadd.f32 %v638, 1.0
    %v642 = vrcp.pop %v639
    %v643 = vmul.f32 1.0, %v642
    %v644 = vrcp.pop %v640
    %v645 = vmul.f32 1.0, %v644
    %v646 = vrcp.pop %v641
    %v647 = vmul.f32 1.0, %v646
    %v648 = vtanh.pop %v629
    %v649 = vmul.f32 %v645, %v379
    %v650 = vmul.f32 %v643, %v648
    %v651 = vadd.f32 %v649, %v650
    %v652 = vtanh.pop %v651
    %v653 = vmul.f32 %v647, %v652
    %v654 = vpack.c.bf16 %v653, %v653
    %s655 = scalar_lea.vmem [#allocation2], 32
    %v656 = vld [vmem:[%s655] sm:$0xff]
    %v657 = vld [vmem:[%s655 + $0x8] sm:$0xff]
    %v658 = vld [vmem:[%s655 + $0x10] sm:$0xff]
    %v659 = vld [vmem:[%s655 + $0x18] sm:$0xff]
    %660 = vmatprep.subr.bf16.mxu0 %v481
    %661 = vmatpush1.bf16.msra.mxu0 %v480
    %662 = vmatprep.subr.bf16.mxu0 %v485
    %663 = vmatpush1.bf16.msra.mxu0 %v484
    %664 = vmatprep.subr.bf16.mxu0 %v489
    %665 = vmatpush1.bf16.msra.mxu0 %v488
    %666 = vmatprep.subr.bf16.mxu0 %v493
    %667 = vmatpush1.bf16.msra.mxu0 %v492
    %668 = vmatprep.subr.bf16.mxu0 %v497
    %669 = vmatpush1.bf16.msra.mxu0 %v496
    %670 = vmatprep.subr.bf16.mxu0 %v501
    %671 = vmatpush1.bf16.msra.mxu0 %v500
    %672 = vmatprep.subr.bf16.mxu0 %v505
    %673 = vmatpush1.bf16.msra.mxu0 %v504
    %674 = vmatprep.subr.bf16.mxu0 %v509
    %675 = vmatpush1.bf16.msra.mxu0 %v508
    %676 = vmatprep.subr.bf16.mxu0 0
    %677 = vmatpush1.bf16.msra.mxu0 0
    %678 = vmatprep.subr.bf16.mxu0 0
    %679 = vmatpush1.bf16.msra.mxu0 0
    %680 = vmatprep.subr.bf16.mxu0 0
    %681 = vmatpush1.bf16.msra.mxu0 0
    %682 = vmatprep.subr.bf16.mxu0 0
    %683 = vmatpush1.bf16.msra.mxu0 0
    %684 = vmatprep.subr.bf16.mxu0 0
    %685 = vmatpush1.bf16.msra.mxu0 0
    %686 = vmatprep.subr.bf16.mxu0 0
    %687 = vmatpush1.bf16.msra.mxu0 0
    %688 = vmatprep.subr.bf16.mxu0 0
    %689 = vmatpush1.bf16.msra.mxu0 0
    %690 = vmatprep.subr.bf16.mxu0 0
    %691 = vmatpush1.bf16.msra.mxu0 0
    %692 = vmatprep.mubr.bf16.mxu0 0
    %693 = vmatmul.mubr.bf16.gmra.mrb[0].mxu0 %v654
    %v694 = vpop.f32.mrb[0].mxu0
    %v695 = vadd.f32 0.0, %v694
    %v696 = vpop.f32.mrb[0].mxu0
    %v697 = vadd.f32 0.0, %v696
    %v698 = vpop.f32.mrb[0].mxu0
    %v699 = vpop.f32.mrb[0].mxu0
    %700 = vdwg.mxu0
    %701 = vmatprep.subr.bf16.mxu0 %v483
    %702 = vmatpush1.bf16.msra.mxu0 %v482
    %703 = vmatprep.subr.bf16.mxu0 %v487
    %704 = vmatpush1.bf16.msra.mxu0 %v486
    %705 = vmatprep.subr.bf16.mxu0 %v491
    %706 = vmatpush1.bf16.msra.mxu0 %v490
    %707 = vmatprep.subr.bf16.mxu0 %v495
    %708 = vmatpush1.bf16.msra.mxu0 %v494
    %709 = vmatprep.subr.bf16.mxu0 %v499
    %710 = vmatpush1.bf16.msra.mxu0 %v498
    %711 = vmatprep.subr.bf16.mxu0 %v503
    %712 = vmatpush1.bf16.msra.mxu0 %v502
    %713 = vmatprep.subr.bf16.mxu0 %v507
    %714 = vmatpush1.bf16.msra.mxu0 %v506
    %715 = vmatprep.subr.bf16.mxu0 %v511
    %716 = vmatpush1.bf16.msra.mxu0 %v510
    %717 = vmatprep.subr.bf16.mxu0 0
    %718 = vmatpush1.bf16.msra.mxu0 0
    %719 = vmatprep.subr.bf16.mxu0 0
    %720 = vmatpush1.bf16.msra.mxu0 0
    %721 = vmatprep.subr.bf16.mxu0 0
    %722 = vmatpush1.bf16.msra.mxu0 0
    %723 = vmatprep.subr.bf16.mxu0 0
    %724 = vmatpush1.bf16.msra.mxu0 0
    %725 = vmatprep.subr.bf16.mxu0 0
    %726 = vmatpush1.bf16.msra.mxu0 0
    %727 = vmatprep.subr.bf16.mxu0 0
    %728 = vmatpush1.bf16.msra.mxu0 0
    %729 = vmatprep.subr.bf16.mxu0 0
    %730 = vmatpush1.bf16.msra.mxu0 0
    %731 = vmatprep.subr.bf16.mxu0 0
    %732 = vmatpush1.bf16.msra.mxu0 0
    %733 = vmatprep.mubr.bf16.mxu0 0
    %734 = vmatmul.mubr.bf16.gmra.mrb[0].mxu0 %v654
    %v735 = vpop.f32.mrb[0].mxu0
    %v736 = vadd.f32 0.0, %v735
    %v737 = vpop.f32.mrb[0].mxu0
    %v738 = vadd.f32 0.0, %v737
    %v739 = vpop.f32.mrb[0].mxu0
    %v740 = vpop.f32.mrb[0].mxu0
    %741 = vdwg.mxu0
    %v742 = vadd.f32 %v656, %v695
    %v743 = vadd.f32 %v657, %v697
    %v744 = vadd.f32 %v658, %v736
    %v745 = vadd.f32 %v659, %v738
    %v746 = vxor.u32 %v742, 2147483648
    %v747 = vxor.u32 %v743, 2147483648
    %v748 = vxor.u32 %v744, 2147483648
    %v749 = vmul.f32 %v746, 1.442695
    %v750 = vpow.pop %v749
    %v751 = vmul.f32 %v747, 1.442695
    %v752 = vpow.pop %v751
    %v753 = vmul.f32 %v748, 1.442695
    %v754 = vpow.pop %v753
    %v755 = vadd.f32 %v750, 1.0
    %v756 = vadd.f32 %v752, 1.0
    %v757 = vadd.f32 %v754, 1.0
    %v758 = vrcp.pop %v755
    %v759 = vmul.f32 1.0, %v758
    %v760 = vrcp.pop %v756
    %v761 = vmul.f32 1.0, %v760
    %v762 = vrcp.pop %v757
    %v763 = vmul.f32 1.0, %v762
    %v764 = vtanh.pop %v745
    %v765 = vmul.f32 %v761, %v651
    %v766 = vmul.f32 %v759, %v764
    %v767 = vadd.f32 %v765, %v766
    %v768 = vtanh.pop %v767
    %v769 = vmul.f32 %v763, %v768
    %v770 = vpack.c.bf16 %v769, %v769
    %s771 = scalar_lea.vmem [#allocation2], 64
    %v772 = vld [vmem:[%s771] sm:$0xff]
    %v773 = vld [vmem:[%s771 + $0x8] sm:$0xff]
    %v774 = vld [vmem:[%s771 + $0x10] sm:$0xff]
    %v775 = vld [vmem:[%s771 + $0x18] sm:$0xff]
    %776 = vmatprep.subr.bf16.mxu0 %v481
    %777 = vmatpush1.bf16.msra.mxu0 %v480
    %778 = vmatprep.subr.bf16.mxu0 %v485
    %779 = vmatpush1.bf16.msra.mxu0 %v484
    %780 = vmatprep.subr.bf16.mxu0 %v489
    %781 = vmatpush1.bf16.msra.mxu0 %v488
    %782 = vmatprep.subr.bf16.mxu0 %v493
    %783 = vmatpush1.bf16.msra.mxu0 %v492
    %784 = vmatprep.subr.bf16.mxu0 %v497
    %785 = vmatpush1.bf16.msra.mxu0 %v496
    %786 = vmatprep.subr.bf16.mxu0 %v501
    %787 = vmatpush1.bf16.msra.mxu0 %v500
    %788 = vmatprep.subr.bf16.mxu0 %v505
    %789 = vmatpush1.bf16.msra.mxu0 %v504
    %790 = vmatprep.subr.bf16.mxu0 %v509
    %791 = vmatpush1.bf16.msra.mxu0 %v508
    %792 = vmatprep.subr.bf16.mxu0 0
    %793 = vmatpush1.bf16.msra.mxu0 0
    %794 = vmatprep.subr.bf16.mxu0 0
    %795 = vmatpush1.bf16.msra.mxu0 0
    %796 = vmatprep.subr.bf16.mxu0 0
    %797 = vmatpush1.bf16.msra.mxu0 0
    %798 = vmatprep.subr.bf16.mxu0 0
    %799 = vmatpush1.bf16.msra.mxu0 0
    %800 = vmatprep.subr.bf16.mxu0 0
    %801 = vmatpush1.bf16.msra.mxu0 0
    %802 = vmatprep.subr.bf16.mxu0 0
    %803 = vmatpush1.bf16.msra.mxu0 0
    %804 = vmatprep.subr.bf16.mxu0 0
    %805 = vmatpush1.bf16.msra.mxu0 0
    %806 = vmatprep.subr.bf16.mxu0 0
    %807 = vmatpush1.bf16.msra.mxu0 0
    %808 = vmatprep.mubr.bf16.mxu0 0
    %809 = vmatmul.mubr.bf16.gmra.mrb[0].mxu0 %v770
    %v810 = vpop.f32.mrb[0].mxu0
    %v811 = vadd.f32 0.0, %v810
    %v812 = vpop.f32.mrb[0].mxu0
    %v813 = vadd.f32 0.0, %v812
    %v814 = vpop.f32.mrb[0].mxu0
    %v815 = vpop.f32.mrb[0].mxu0
    %816 = vdwg.mxu0
    %817 = vmatprep.subr.bf16.mxu0 %v483
    %818 = vmatpush1.bf16.msra.mxu0 %v482
    %819 = vmatprep.subr.bf16.mxu0 %v487
    %820 = vmatpush1.bf16.msra.mxu0 %v486
    %821 = vmatprep.subr.bf16.mxu0 %v491
    %822 = vmatpush1.bf16.msra.mxu0 %v490
    %823 = vmatprep.subr.bf16.mxu0 %v495
    %824 = vmatpush1.bf16.msra.mxu0 %v494
    %825 = vmatprep.subr.bf16.mxu0 %v499
    %826 = vmatpush1.bf16.msra.mxu0 %v498
    %827 = vmatprep.subr.bf16.mxu0 %v503
    %828 = vmatpush1.bf16.msra.mxu0 %v502
    %829 = vmatprep.subr.bf16.mxu0 %v507
    %830 = vmatpush1.bf16.msra.mxu0 %v506
    %831 = vmatprep.subr.bf16.mxu0 %v511
    %832 = vmatpush1.bf16.msra.mxu0 %v510
    %833 = vmatprep.subr.bf16.mxu0 0
    %834 = vmatpush1.bf16.msra.mxu0 0
    %835 = vmatprep.subr.bf16.mxu0 0
    %836 = vmatpush1.bf16.msra.mxu0 0
    %837 = vmatprep.subr.bf16.mxu0 0
    %838 = vmatpush1.bf16.msra.mxu0 0
    %839 = vmatprep.subr.bf16.mxu0 0
    %840 = vmatpush1.bf16.msra.mxu0 0
    %841 = vmatprep.subr.bf16.mxu0 0
    %842 = vmatpush1.bf16.msra.mxu0 0
    %843 = vmatprep.subr.bf16.mxu0 0
    %844 = vmatpush1.bf16.msra.mxu0 0
    %845 = vmatprep.subr.bf16.mxu0 0
    %846 = vmatpush1.bf16.msra.mxu0 0
    %847 = vmatprep.subr.bf16.mxu0 0
    %848 = vmatpush1.bf16.msra.mxu0 0
    %849 = vmatprep.mubr.bf16.mxu0 0
    %850 = vmatmul.mubr.bf16.gmra.mrb[0].mxu0 %v770
    %v851 = vpop.f32.mrb[0].mxu0
    %v852 = vadd.f32 0.0, %v851
    %v853 = vpop.f32.mrb[0].mxu0
    %v854 = vadd.f32 0.0, %v853
    %v855 = vpop.f32.mrb[0].mxu0
    %v856 = vpop.f32.mrb[0].mxu0
    %857 = vdwg.mxu0
    %v858 = vadd.f32 %v772, %v811
    %v859 = vadd.f32 %v773, %v813
    %v860 = vadd.f32 %v774, %v852
    %v861 = vadd.f32 %v775, %v854
    %v862 = vxor.u32 %v858, 2147483648
    %v863 = vxor.u32 %v859, 2147483648
    %v864 = vxor.u32 %v860, 2147483648
    %v865 = vmul.f32 %v862, 1.442695
    %v866 = vpow.pop %v865
    %v867 = vmul.f32 %v863, 1.442695
    %v868 = vpow.pop %v867
    %v869 = vmul.f32 %v864, 1.442695
    %v870 = vpow.pop %v869
    %v871 = vadd.f32 %v866, 1.0
    %v872 = vadd.f32 %v868, 1.0
    %v873 = vadd.f32 %v870, 1.0
    %v874 = vrcp.pop %v871
    %v875 = vmul.f32 1.0, %v874
    %v876 = vrcp.pop %v872
    %v877 = vmul.f32 1.0, %v876
    %v878 = vrcp.pop %v873
    %v879 = vmul.f32 1.0, %v878
    %v880 = vtanh.pop %v861
    %v881 = vmul.f32 %v877, %v767
    %v882 = vmul.f32 %v875, %v880
    %v883 = vadd.f32 %v881, %v882
    %v884 = vtanh.pop %v883
    %v885 = vmul.f32 %v879, %v884
    %v886 = vpack.c.bf16 %v885, %v885
    %s887 = scalar_lea.vmem [#allocation2], 96
    %v888 = vld [vmem:[%s887] sm:$0xff]
    %v889 = vld [vmem:[%s887 + $0x8] sm:$0xff]
    %v890 = vld [vmem:[%s887 + $0x10] sm:$0xff]
    %v891 = vld [vmem:[%s887 + $0x18] sm:$0xff]
    %892 = vmatprep.subr.bf16.mxu0 %v481
    %893 = vmatpush1.bf16.msra.mxu0 %v480
    %894 = vmatprep.subr.bf16.mxu0 %v485
    %895 = vmatpush1.bf16.msra.mxu0 %v484
    %896 = vmatprep.subr.bf16.mxu0 %v489
    %897 = vmatpush1.bf16.msra.mxu0 %v488
    %898 = vmatprep.subr.bf16.mxu0 %v493
    %899 = vmatpush1.bf16.msra.mxu0 %v492
    %900 = vmatprep.subr.bf16.mxu0 %v497
    %901 = vmatpush1.bf16.msra.mxu0 %v496
    %902 = vmatprep.subr.bf16.mxu0 %v501
    %903 = vmatpush1.bf16.msra.mxu0 %v500
    %904 = vmatprep.subr.bf16.mxu0 %v505
    %905 = vmatpush1.bf16.msra.mxu0 %v504
    %906 = vmatprep.subr.bf16.mxu0 %v509
    %907 = vmatpush1.bf16.msra.mxu0 %v508
    %908 = vmatprep.subr.bf16.mxu0 0
    %909 = vmatpush1.bf16.msra.mxu0 0
    %910 = vmatprep.subr.bf16.mxu0 0
    %911 = vmatpush1.bf16.msra.mxu0 0
    %912 = vmatprep.subr.bf16.mxu0 0
    %913 = vmatpush1.bf16.msra.mxu0 0
    %914 = vmatprep.subr.bf16.mxu0 0
    %915 = vmatpush1.bf16.msra.mxu0 0
    %916 = vmatprep.subr.bf16.mxu0 0
    %917 = vmatpush1.bf16.msra.mxu0 0
    %918 = vmatprep.subr.bf16.mxu0 0
    %919 = vmatpush1.bf16.msra.mxu0 0
    %920 = vmatprep.subr.bf16.mxu0 0
    %921 = vmatpush1.bf16.msra.mxu0 0
    %922 = vmatprep.subr.bf16.mxu0 0
    %923 = vmatpush1.bf16.msra.mxu0 0
    %924 = vmatprep.mubr.bf16.mxu0 0
    %925 = vmatmul.mubr.bf16.gmra.mrb[0].mxu0 %v886
    %v926 = vpop.f32.mrb[0].mxu0
    %v927 = vadd.f32 0.0, %v926
    %v928 = vpop.f32.mrb[0].mxu0
    %v929 = vadd.f32 0.0, %v928
    %v930 = vpop.f32.mrb[0].mxu0
    %v931 = vpop.f32.mrb[0].mxu0
    %932 = vdwg.mxu0
    %933 = vmatprep.subr.bf16.mxu0 %v483
    %934 = vmatpush1.bf16.msra.mxu0 %v482
    %935 = vmatprep.subr.bf16.mxu0 %v487
    %936 = vmatpush1.bf16.msra.mxu0 %v486
    %937 = vmatprep.subr.bf16.mxu0 %v491
    %938 = vmatpush1.bf16.msra.mxu0 %v490
    %939 = vmatprep.subr.bf16.mxu0 %v495
    %940 = vmatpush1.bf16.msra.mxu0 %v494
    %941 = vmatprep.subr.bf16.mxu0 %v499
    %942 = vmatpush1.bf16.msra.mxu0 %v498
    %943 = vmatprep.subr.bf16.mxu0 %v503
    %944 = vmatpush1.bf16.msra.mxu0 %v502
    %945 = vmatprep.subr.bf16.mxu0 %v507
    %946 = vmatpush1.bf16.msra.mxu0 %v506
    %947 = vmatprep.subr.bf16.mxu0 %v511
    %948 = vmatpush1.bf16.msra.mxu0 %v510
    %949 = vmatprep.subr.bf16.mxu0 0
    %950 = vmatpush1.bf16.msra.mxu0 0
    %951 = vmatprep.subr.bf16.mxu0 0
    %952 = vmatpush1.bf16.msra.mxu0 0
    %953 = vmatprep.subr.bf16.mxu0 0
    %954 = vmatpush1.bf16.msra.mxu0 0
    %955 = vmatprep.subr.bf16.mxu0 0
    %956 = vmatpush1.bf16.msra.mxu0 0
    %957 = vmatprep.subr.bf16.mxu0 0
    %958 = vmatpush1.bf16.msra.mxu0 0
    %959 = vmatprep.subr.bf16.mxu0 0
    %960 = vmatpush1.bf16.msra.mxu0 0
    %961 = vmatprep.subr.bf16.mxu0 0
    %962 = vmatpush1.bf16.msra.mxu0 0
    %963 = vmatprep.subr.bf16.mxu0 0
    %964 = vmatpush1.bf16.msra.mxu0 0
    %965 = vmatprep.mubr.bf16.mxu0 0
    %966 = vmatmul.mubr.bf16.gmra.mrb[0].mxu0 %v886
    %v967 = vpop.f32.mrb[0].mxu0
    %v968 = vadd.f32 0.0, %v967
    %v969 = vpop.f32.mrb[0].mxu0
    %v970 = vadd.f32 0.0, %v969
    %v971 = vpop.f32.mrb[0].mxu0
    %v972 = vpop.f32.mrb[0].mxu0
    %973 = vdwg.mxu0
    %v974 = vadd.f32 %v888, %v927
    %v975 = vadd.f32 %v889, %v929
    %v976 = vadd.f32 %v890, %v968
    %v977 = vadd.f32 %v891, %v970
    %v978 = vxor.u32 %v974, 2147483648
    %v979 = vxor.u32 %v975, 2147483648
    %v980 = vxor.u32 %v976, 2147483648
    %v981 = vmul.f32 %v978, 1.442695
    %v982 = vpow.pop %v981
    %v983 = vmul.f32 %v979, 1.442695
    %v984 = vpow.pop %v983
    %v985 = vmul.f32 %v980, 1.442695
    %v986 = vpow.pop %v985
    %v987 = vadd.f32 %v982, 1.0
    %v988 = vadd.f32 %v984, 1.0
    %v989 = vadd.f32 %v986, 1.0
    %v990 = vrcp.pop %v987
    %v991 = vmul.f32 1.0, %v990
    %v992 = vrcp.pop %v988
    %v993 = vmul.f32 1.0, %v992
    %v994 = vrcp.pop %v989
    %v995 = vmul.f32 1.0, %v994
    %v996 = vtanh.pop %v977
    %v997 = vmul.f32 %v993, %v883
    %v998 = vmul.f32 %v991, %v996
    %v999 = vadd.f32 %v997, %v998
    %v1000 = vtanh.pop %v999
    %v1001 = vmul.f32 %v995, %v1000
    %v1002 = vpack.c.bf16 %v1001, %v1001
    %s1003 = scalar_lea.vmem [#allocation2], 128
    %v1004 = vld [vmem:[%s1003] sm:$0xff]
    %v1005 = vld [vmem:[%s1003 + $0x8] sm:$0xff]
    %v1006 = vld [vmem:[%s1003 + $0x10] sm:$0xff]
    %v1007 = vld [vmem:[%s1003 + $0x18] sm:$0xff]
    %1008 = vmatprep.subr.bf16.mxu0 %v481
    %1009 = vmatpush1.bf16.msra.mxu0 %v480
    %1010 = vmatprep.subr.bf16.mxu0 %v485
    %1011 = vmatpush1.bf16.msra.mxu0 %v484
    %1012 = vmatprep.subr.bf16.mxu0 %v489
    %1013 = vmatpush1.bf16.msra.mxu0 %v488
    %1014 = vmatprep.subr.bf16.mxu0 %v493
    %1015 = vmatpush1.bf16.msra.mxu0 %v492
    %1016 = vmatprep.subr.bf16.mxu0 %v497
    %1017 = vmatpush1.bf16.msra.mxu0 %v496
    %1018 = vmatprep.subr.bf16.mxu0 %v501
    %1019 = vmatpush1.bf16.msra.mxu0 %v500
    %1020 = vmatprep.subr.bf16.mxu0 %v505
    %1021 = vmatpush1.bf16.msra.mxu0 %v504
    %1022 = vmatprep.subr.bf16.mxu0 %v509
    %1023 = vmatpush1.bf16.msra.mxu0 %v508
    %1024 = vmatprep.subr.bf16.mxu0 0
    %1025 = vmatpush1.bf16.msra.mxu0 0
    %1026 = vmatprep.subr.bf16.mxu0 0
    %1027 = vmatpush1.bf16.msra.mxu0 0
    %1028 = vmatprep.subr.bf16.mxu0 0
    %1029 = vmatpush1.bf16.msra.mxu0 0
    %1030 = vmatprep.subr.bf16.mxu0 0
    %1031 = vmatpush1.bf16.msra.mxu0 0
    %1032 = vmatprep.subr.bf16.mxu0 0
    %1033 = vmatpush1.bf16.msra.mxu0 0
    %1034 = vmatprep.subr.bf16.mxu0 0
    %1035 = vmatpush1.bf16.msra.mxu0 0
    %1036 = vmatprep.subr.bf16.mxu0 0
    %1037 = vmatpush1.bf16.msra.mxu0 0
    %1038 = vmatprep.subr.bf16.mxu0 0
    %1039 = vmatpush1.bf16.msra.mxu0 0
    %1040 = vmatprep.mubr.bf16.mxu0 0
    %1041 = vmatmul.mubr.bf16.gmra.mrb[0].mxu0 %v1002
    %v1042 = vpop.f32.mrb[0].mxu0
    %v1043 = vadd.f32 0.0, %v1042
    %v1044 = vpop.f32.mrb[0].mxu0
    %v1045 = vadd.f32 0.0, %v1044
    %v1046 = vpop.f32.mrb[0].mxu0
    %v1047 = vpop.f32.mrb[0].mxu0
    %1048 = vdwg.mxu0
    %1049 = vmatprep.subr.bf16.mxu0 %v483
    %1050 = vmatpush1.bf16.msra.mxu0 %v482
    %1051 = vmatprep.subr.bf16.mxu0 %v487
    %1052 = vmatpush1.bf16.msra.mxu0 %v486
    %1053 = vmatprep.subr.bf16.mxu0 %v491
    %1054 = vmatpush1.bf16.msra.mxu0 %v490
    %1055 = vmatprep.subr.bf16.mxu0 %v495
    %1056 = vmatpush1.bf16.msra.mxu0 %v494
    %1057 = vmatprep.subr.bf16.mxu0 %v499
    %1058 = vmatpush1.bf16.msra.mxu0 %v498
    %1059 = vmatprep.subr.bf16.mxu0 %v503
    %1060 = vmatpush1.bf16.msra.mxu0 %v502
    %1061 = vmatprep.subr.bf16.mxu0 %v507
    %1062 = vmatpush1.bf16.msra.mxu0 %v506
    %1063 = vmatprep.subr.bf16.mxu0 %v511
    %1064 = vmatpush1.bf16.msra.mxu0 %v510
    %1065 = vmatprep.subr.bf16.mxu0 0
    %1066 = vmatpush1.bf16.msra.mxu0 0
    %1067 = vmatprep.subr.bf16.mxu0 0
    %1068 = vmatpush1.bf16.msra.mxu0 0
    %1069 = vmatprep.subr.bf16.mxu0 0
    %1070 = vmatpush1.bf16.msra.mxu0 0
    %1071 = vmatprep.subr.bf16.mxu0 0
    %1072 = vmatpush1.bf16.msra.mxu0 0
    %1073 = vmatprep.subr.bf16.mxu0 0
    %1074 = vmatpush1.bf16.msra.mxu0 0
    %1075 = vmatprep.subr.bf16.mxu0 0
    %1076 = vmatpush1.bf16.msra.mxu0 0
    %1077 = vmatprep.subr.bf16.mxu0 0
    %1078 = vmatpush1.bf16.msra.mxu0 0
    %1079 = vmatprep.subr.bf16.mxu0 0
    %1080 = vmatpush1.bf16.msra.mxu0 0
    %1081 = vmatprep.mubr.bf16.mxu0 0
    %1082 = vmatmul.mubr.bf16.gmra.mrb[0].mxu0 %v1002
    %v1083 = vpop.f32.mrb[0].mxu0
    %v1084 = vadd.f32 0.0, %v1083
    %v1085 = vpop.f32.mrb[0].mxu0
    %v1086 = vadd.f32 0.0, %v1085
    %v1087 = vpop.f32.mrb[0].mxu0
    %v1088 = vpop.f32.mrb[0].mxu0
    %1089 = vdwg.mxu0
    %v1090 = vadd.f32 %v1004, %v1043
    %v1091 = vadd.f32 %v1005, %v1045
    %v1092 = vadd.f32 %v1006, %v1084
    %v1093 = vadd.f32 %v1007, %v1086
    %v1094 = vxor.u32 %v1090, 2147483648
    %v1095 = vxor.u32 %v1091, 2147483648
    %v1096 = vxor.u32 %v1092, 2147483648
    %v1097 = vmul.f32 %v1094, 1.442695
    %v1098 = vpow.pop %v1097
    %v1099 = vmul.f32 %v1095, 1.442695
    %v1100 = vpow.pop %v1099
    %v1101 = vmul.f32 %v1096, 1.442695
    %v1102 = vpow.pop %v1101
    %v1103 = vadd.f32 %v1098, 1.0
    %v1104 = vadd.f32 %v1100, 1.0
    %v1105 = vadd.f32 %v1102, 1.0
    %v1106 = vrcp.pop %v1103
    %v1107 = vmul.f32 1.0, %v1106
    %v1108 = vrcp.pop %v1104
    %v1109 = vmul.f32 1.0, %v1108
    %v1110 = vrcp.pop %v1105
    %v1111 = vmul.f32 1.0, %v1110
    %v1112 = vtanh.pop %v1093
    %v1113 = vmul.f32 %v1109, %v999
    %v1114 = vmul.f32 %v1107, %v1112
    %v1115 = vadd.f32 %v1113, %v1114
    %v1116 = vtanh.pop %v1115
    %v1117 = vmul.f32 %v1111, %v1116
    %v1118 = vpack.c.bf16 %v1117, %v1117
    %s1119 = scalar_lea.vmem [#allocation2], 160
    %v1120 = vld [vmem:[%s1119] sm:$0xff]
    %v1121 = vld [vmem:[%s1119 + $0x8] sm:$0xff]
    %v1122 = vld [vmem:[%s1119 + $0x10] sm:$0xff]
    %v1123 = vld [vmem:[%s1119 + $0x18] sm:$0xff]
    %1124 = vmatprep.subr.bf16.mxu0 %v481
    %1125 = vmatpush1.bf16.msra.mxu0 %v480
    %1126 = vmatprep.subr.bf16.mxu0 %v485
    %1127 = vmatpush1.bf16.msra.mxu0 %v484
    %1128 = vmatprep.subr.bf16.mxu0 %v489
    %1129 = vmatpush1.bf16.msra.mxu0 %v488
    %1130 = vmatprep.subr.bf16.mxu0 %v493
    %1131 = vmatpush1.bf16.msra.mxu0 %v492
    %1132 = vmatprep.subr.bf16.mxu0 %v497
    %1133 = vmatpush1.bf16.msra.mxu0 %v496
    %1134 = vmatprep.subr.bf16.mxu0 %v501
    %1135 = vmatpush1.bf16.msra.mxu0 %v500
    %1136 = vmatprep.subr.bf16.mxu0 %v505
    %1137 = vmatpush1.bf16.msra.mxu0 %v504
    %1138 = vmatprep.subr.bf16.mxu0 %v509
    %1139 = vmatpush1.bf16.msra.mxu0 %v508
    %1140 = vmatprep.subr.bf16.mxu0 0
    %1141 = vmatpush1.bf16.msra.mxu0 0
    %1142 = vmatprep.subr.bf16.mxu0 0
    %1143 = vmatpush1.bf16.msra.mxu0 0
    %1144 = vmatprep.subr.bf16.mxu0 0
    %1145 = vmatpush1.bf16.msra.mxu0 0
    %1146 = vmatprep.subr.bf16.mxu0 0
    %1147 = vmatpush1.bf16.msra.mxu0 0
    %1148 = vmatprep.subr.bf16.mxu0 0
    %1149 = vmatpush1.bf16.msra.mxu0 0
    %1150 = vmatprep.subr.bf16.mxu0 0
    %1151 = vmatpush1.bf16.msra.mxu0 0
    %1152 = vmatprep.subr.bf16.mxu0 0
    %1153 = vmatpush1.bf16.msra.mxu0 0
    %1154 = vmatprep.subr.bf16.mxu0 0
    %1155 = vmatpush1.bf16.msra.mxu0 0
    %1156 = vmatprep.mubr.bf16.mxu0 0
    %1157 = vmatmul.mubr.bf16.gmra.mrb[0].mxu0 %v1118
    %v1158 = vpop.f32.mrb[0].mxu0
    %v1159 = vadd.f32 0.0, %v1158
    %v1160 = vpop.f32.mrb[0].mxu0
    %v1161 = vadd.f32 0.0, %v1160
    %v1162 = vpop.f32.mrb[0].mxu0
    %v1163 = vpop.f32.mrb[0].mxu0
    %1164 = vdwg.mxu0
    %1165 = vmatprep.subr.bf16.mxu0 %v483
    %1166 = vmatpush1.bf16.msra.mxu0 %v482
    %1167 = vmatprep.subr.bf16.mxu0 %v487
    %1168 = vmatpush1.bf16.msra.mxu0 %v486
    %1169 = vmatprep.subr.bf16.mxu0 %v491
    %1170 = vmatpush1.bf16.msra.mxu0 %v490
    %1171 = vmatprep.subr.bf16.mxu0 %v495
    %1172 = vmatpush1.bf16.msra.mxu0 %v494
    %1173 = vmatprep.subr.bf16.mxu0 %v499
    %1174 = vmatpush1.bf16.msra.mxu0 %v498
    %1175 = vmatprep.subr.bf16.mxu0 %v503
    %1176 = vmatpush1.bf16.msra.mxu0 %v502
    %1177 = vmatprep.subr.bf16.mxu0 %v507
    %1178 = vmatpush1.bf16.msra.mxu0 %v506
    %1179 = vmatprep.subr.bf16.mxu0 %v511
    %1180 = vmatpush1.bf16.msra.mxu0 %v510
    %1181 = vmatprep.subr.bf16.mxu0 0
    %1182 = vmatpush1.bf16.msra.mxu0 0
    %1183 = vmatprep.subr.bf16.mxu0 0
    %1184 = vmatpush1.bf16.msra.mxu0 0
    %1185 = vmatprep.subr.bf16.mxu0 0
    %1186 = vmatpush1.bf16.msra.mxu0 0
    %1187 = vmatprep.subr.bf16.mxu0 0
    %1188 = vmatpush1.bf16.msra.mxu0 0
    %1189 = vmatprep.subr.bf16.mxu0 0
    %1190 = vmatpush1.bf16.msra.mxu0 0
    %1191 = vmatprep.subr.bf16.mxu0 0
    %1192 = vmatpush1.bf16.msra.mxu0 0
    %1193 = vmatprep.subr.bf16.mxu0 0
    %1194 = vmatpush1.bf16.msra.mxu0 0
    %1195 = vmatprep.subr.bf16.mxu0 0
    %1196 = vmatpush1.bf16.msra.mxu0 0
    %1197 = vmatprep.mubr.bf16.mxu0 0
    %1198 = vmatmul.mubr.bf16.gmra.mrb[0].mxu0 %v1118
    %v1199 = vpop.f32.mrb[0].mxu0
    %v1200 = vadd.f32 0.0, %v1199
    %v1201 = vpop.f32.mrb[0].mxu0
    %v1202 = vadd.f32 0.0, %v1201
    %v1203 = vpop.f32.mrb[0].mxu0
    %v1204 = vpop.f32.mrb[0].mxu0
    %1205 = vdwg.mxu0
    %v1206 = vadd.f32 %v1120, %v1159
    %v1207 = vadd.f32 %v1121, %v1161
    %v1208 = vadd.f32 %v1122, %v1200
    %v1209 = vadd.f32 %v1123, %v1202
    %v1210 = vxor.u32 %v1206, 2147483648
    %v1211 = vxor.u32 %v1207, 2147483648
    %v1212 = vxor.u32 %v1208, 2147483648
    %v1213 = vmul.f32 %v1210, 1.442695
    %v1214 = vpow.pop %v1213
    %v1215 = vmul.f32 %v1211, 1.442695
    %v1216 = vpow.pop %v1215
    %v1217 = vmul.f32 %v1212, 1.442695
    %v1218 = vpow.pop %v1217
    %v1219 = vadd.f32 %v1214, 1.0
    %v1220 = vadd.f32 %v1216, 1.0
    %v1221 = vadd.f32 %v1218, 1.0
    %v1222 = vrcp.pop %v1219
    %v1223 = vmul.f32 1.0, %v1222
    %v1224 = vrcp.pop %v1220
    %v1225 = vmul.f32 1.0, %v1224
    %v1226 = vrcp.pop %v1221
    %v1227 = vmul.f32 1.0, %v1226
    %v1228 = vtanh.pop %v1209
    %v1229 = vmul.f32 %v1225, %v1115
    %v1230 = vmul.f32 %v1223, %v1228
    %v1231 = vadd.f32 %v1229, %v1230
    %v1232 = vtanh.pop %v1231
    %v1233 = vmul.f32 %v1227, %v1232
    %v1234 = vpack.c.bf16 %v1233, %v1233
    %s1235 = scalar_lea.vmem [#allocation2], 192
    %v1236 = vld [vmem:[%s1235] sm:$0xff]
    %v1237 = vld [vmem:[%s1235 + $0x8] sm:$0xff]
    %v1238 = vld [vmem:[%s1235 + $0x10] sm:$0xff]
    %v1239 = vld [vmem:[%s1235 + $0x18] sm:$0xff]
    %1240 = vmatprep.subr.bf16.mxu0 %v481
    %1241 = vmatpush1.bf16.msra.mxu0 %v480
    %1242 = vmatprep.subr.bf16.mxu0 %v485
    %1243 = vmatpush1.bf16.msra.mxu0 %v484
    %1244 = vmatprep.subr.bf16.mxu0 %v489
    %1245 = vmatpush1.bf16.msra.mxu0 %v488
    %1246 = vmatprep.subr.bf16.mxu0 %v493
    %1247 = vmatpush1.bf16.msra.mxu0 %v492
    %1248 = vmatprep.subr.bf16.mxu0 %v497
    %1249 = vmatpush1.bf16.msra.mxu0 %v496
    %1250 = vmatprep.subr.bf16.mxu0 %v501
    %1251 = vmatpush1.bf16.msra.mxu0 %v500
    %1252 = vmatprep.subr.bf16.mxu0 %v505
    %1253 = vmatpush1.bf16.msra.mxu0 %v504
    %1254 = vmatprep.subr.bf16.mxu0 %v509
    %1255 = vmatpush1.bf16.msra.mxu0 %v508
    %1256 = vmatprep.subr.bf16.mxu0 0
    %1257 = vmatpush1.bf16.msra.mxu0 0
    %1258 = vmatprep.subr.bf16.mxu0 0
    %1259 = vmatpush1.bf16.msra.mxu0 0
    %1260 = vmatprep.subr.bf16.mxu0 0
    %1261 = vmatpush1.bf16.msra.mxu0 0
    %1262 = vmatprep.subr.bf16.mxu0 0
    %1263 = vmatpush1.bf16.msra.mxu0 0
    %1264 = vmatprep.subr.bf16.mxu0 0
    %1265 = vmatpush1.bf16.msra.mxu0 0
    %1266 = vmatprep.subr.bf16.mxu0 0
    %1267 = vmatpush1.bf16.msra.mxu0 0
    %1268 = vmatprep.subr.bf16.mxu0 0
    %1269 = vmatpush1.bf16.msra.mxu0 0
    %1270 = vmatprep.subr.bf16.mxu0 0
    %1271 = vmatpush1.bf16.msra.mxu0 0
    %1272 = vmatprep.mubr.bf16.mxu0 0
    %1273 = vmatmul.mubr.bf16.gmra.mrb[0].mxu0 %v1234
    %v1274 = vpop.f32.mrb[0].mxu0
    %v1275 = vadd.f32 0.0, %v1274
    %v1276 = vpop.f32.mrb[0].mxu0
    %v1277 = vadd.f32 0.0, %v1276
    %v1278 = vpop.f32.mrb[0].mxu0
    %v1279 = vpop.f32.mrb[0].mxu0
    %1280 = vdwg.mxu0
    %1281 = vmatprep.subr.bf16.mxu0 %v483
    %1282 = vmatpush1.bf16.msra.mxu0 %v482
    %1283 = vmatprep.subr.bf16.mxu0 %v487
    %1284 = vmatpush1.bf16.msra.mxu0 %v486
    %1285 = vmatprep.subr.bf16.mxu0 %v491
    %1286 = vmatpush1.bf16.msra.mxu0 %v490
    %1287 = vmatprep.subr.bf16.mxu0 %v495
    %1288 = vmatpush1.bf16.msra.mxu0 %v494
    %1289 = vmatprep.subr.bf16.mxu0 %v499
    %1290 = vmatpush1.bf16.msra.mxu0 %v498
    %1291 = vmatprep.subr.bf16.mxu0 %v503
    %1292 = vmatpush1.bf16.msra.mxu0 %v502
    %1293 = vmatprep.subr.bf16.mxu0 %v507
    %1294 = vmatpush1.bf16.msra.mxu0 %v506
    %1295 = vmatprep.subr.bf16.mxu0 %v511
    %1296 = vmatpush1.bf16.msra.mxu0 %v510
    %1297 = vmatprep.subr.bf16.mxu0 0
    %1298 = vmatpush1.bf16.msra.mxu0 0
    %1299 = vmatprep.subr.bf16.mxu0 0
    %1300 = vmatpush1.bf16.msra.mxu0 0
    %1301 = vmatprep.subr.bf16.mxu0 0
    %1302 = vmatpush1.bf16.msra.mxu0 0
    %1303 = vmatprep.subr.bf16.mxu0 0
    %1304 = vmatpush1.bf16.msra.mxu0 0
    %1305 = vmatprep.subr.bf16.mxu0 0
    %1306 = vmatpush1.bf16.msra.mxu0 0
    %1307 = vmatprep.subr.bf16.mxu0 0
    %1308 = vmatpush1.bf16.msra.mxu0 0
    %1309 = vmatprep.subr.bf16.mxu0 0
    %1310 = vmatpush1.bf16.msra.mxu0 0
    %1311 = vmatprep.subr.bf16.mxu0 0
    %1312 = vmatpush1.bf16.msra.mxu0 0
    %1313 = vmatprep.mubr.bf16.mxu0 0
    %1314 = vmatmul.mubr.bf16.gmra.mrb[0].mxu0 %v1234
    %v1315 = vpop.f32.mrb[0].mxu0
    %v1316 = vadd.f32 0.0, %v1315
    %v1317 = vpop.f32.mrb[0].mxu0
    %v1318 = vadd.f32 0.0, %v1317
    %v1319 = vpop.f32.mrb[0].mxu0
    %v1320 = vpop.f32.mrb[0].mxu0
    %1321 = vdwg.mxu0
    %v1322 = vadd.f32 %v1236, %v1275
    %v1323 = vadd.f32 %v1237, %v1277
    %v1324 = vadd.f32 %v1238, %v1316
    %v1325 = vadd.f32 %v1239, %v1318
    %v1326 = vxor.u32 %v1322, 2147483648
    %v1327 = vxor.u32 %v1323, 2147483648
    %v1328 = vxor.u32 %v1324, 2147483648
    %v1329 = vmul.f32 %v1326, 1.442695
    %v1330 = vpow.pop %v1329
    %v1331 = vmul.f32 %v1327, 1.442695
    %v1332 = vpow.pop %v1331
    %v1333 = vmul.f32 %v1328, 1.442695
    %v1334 = vpow.pop %v1333
    %v1335 = vadd.f32 %v1330, 1.0
    %v1336 = vadd.f32 %v1332, 1.0
    %v1337 = vadd.f32 %v1334, 1.0
    %v1338 = vrcp.pop %v1335
    %v1339 = vmul.f32 1.0, %v1338
    %v1340 = vrcp.pop %v1336
    %v1341 = vmul.f32 1.0, %v1340
    %v1342 = vrcp.pop %v1337
    %v1343 = vmul.f32 1.0, %v1342
    %v1344 = vtanh.pop %v1325
    %v1345 = vmul.f32 %v1341, %v1231
    %v1346 = vmul.f32 %v1339, %v1344
    %v1347 = vadd.f32 %v1345, %v1346
    %v1348 = vtanh.pop %v1347
    %v1349 = vmul.f32 %v1343, %v1348
    %v1350 = vpack.c.bf16 %v1349, %v1349
    %s1351 = scalar_lea.vmem [#allocation2], 224
    %v1352 = vld [vmem:[%s1351] sm:$0xff]
    %v1353 = vld [vmem:[%s1351 + $0x8] sm:$0xff]
    %v1354 = vld [vmem:[%s1351 + $0x10] sm:$0xff]
    %v1355 = vld [vmem:[%s1351 + $0x18] sm:$0xff]
    %1356 = vmatprep.subr.bf16.mxu0 %v481
    %1357 = vmatpush1.bf16.msra.mxu0 %v480
    %1358 = vmatprep.subr.bf16.mxu0 %v485
    %1359 = vmatpush1.bf16.msra.mxu0 %v484
    %1360 = vmatprep.subr.bf16.mxu0 %v489
    %1361 = vmatpush1.bf16.msra.mxu0 %v488
    %1362 = vmatprep.subr.bf16.mxu0 %v493
    %1363 = vmatpush1.bf16.msra.mxu0 %v492
    %1364 = vmatprep.subr.bf16.mxu0 %v497
    %1365 = vmatpush1.bf16.msra.mxu0 %v496
    %1366 = vmatprep.subr.bf16.mxu0 %v501
    %1367 = vmatpush1.bf16.msra.mxu0 %v500
    %1368 = vmatprep.subr.bf16.mxu0 %v505
    %1369 = vmatpush1.bf16.msra.mxu0 %v504
    %1370 = vmatprep.subr.bf16.mxu0 %v509
    %1371 = vmatpush1.bf16.msra.mxu0 %v508
    %1372 = vmatprep.subr.bf16.mxu0 0
    %1373 = vmatpush1.bf16.msra.mxu0 0
    %1374 = vmatprep.subr.bf16.mxu0 0
    %1375 = vmatpush1.bf16.msra.mxu0 0
    %1376 = vmatprep.subr.bf16.mxu0 0
    %1377 = vmatpush1.bf16.msra.mxu0 0
    %1378 = vmatprep.subr.bf16.mxu0 0
    %1379 = vmatpush1.bf16.msra.mxu0 0
    %1380 = vmatprep.subr.bf16.mxu0 0
    %1381 = vmatpush1.bf16.msra.mxu0 0
    %1382 = vmatprep.subr.bf16.mxu0 0
    %1383 = vmatpush1.bf16.msra.mxu0 0
    %1384 = vmatprep.subr.bf16.mxu0 0
    %1385 = vmatpush1.bf16.msra.mxu0 0
    %1386 = vmatprep.subr.bf16.mxu0 0
    %1387 = vmatpush1.bf16.msra.mxu0 0
    %1388 = vmatprep.mubr.bf16.mxu0 0
    %1389 = vmatmul.mubr.bf16.gmra.mrb[0].mxu0 %v1350
    %v1390 = vpop.f32.mrb[0].mxu0
    %v1391 = vadd.f32 0.0, %v1390
    %v1392 = vpop.f32.mrb[0].mxu0
    %v1393 = vadd.f32 0.0, %v1392
    %v1394 = vpop.f32.mrb[0].mxu0
    %v1395 = vpop.f32.mrb[0].mxu0
    %1396 = vdwg.mxu0
    %1397 = vmatprep.subr.bf16.mxu0 %v483
    %1398 = vmatpush1.bf16.msra.mxu0 %v482
    %1399 = vmatprep.subr.bf16.mxu0 %v487
    %1400 = vmatpush1.bf16.msra.mxu0 %v486
    %1401 = vmatprep.subr.bf16.mxu0 %v491
    %1402 = vmatpush1.bf16.msra.mxu0 %v490
    %1403 = vmatprep.subr.bf16.mxu0 %v495
    %1404 = vmatpush1.bf16.msra.mxu0 %v494
    %1405 = vmatprep.subr.bf16.mxu0 %v499
    %1406 = vmatpush1.bf16.msra.mxu0 %v498
    %1407 = vmatprep.subr.bf16.mxu0 %v503
    %1408 = vmatpush1.bf16.msra.mxu0 %v502
    %1409 = vmatprep.subr.bf16.mxu0 %v507
    %1410 = vmatpush1.bf16.msra.mxu0 %v506
    %1411 = vmatprep.subr.bf16.mxu0 %v511
    %1412 = vmatpush1.bf16.msra.mxu0 %v510
    %1413 = vmatprep.subr.bf16.mxu0 0
    %1414 = vmatpush1.bf16.msra.mxu0 0
    %1415 = vmatprep.subr.bf16.mxu0 0
    %1416 = vmatpush1.bf16.msra.mxu0 0
    %1417 = vmatprep.subr.bf16.mxu0 0
    %1418 = vmatpush1.bf16.msra.mxu0 0
    %1419 = vmatprep.subr.bf16.mxu0 0
    %1420 = vmatpush1.bf16.msra.mxu0 0
    %1421 = vmatprep.subr.bf16.mxu0 0
    %1422 = vmatpush1.bf16.msra.mxu0 0
    %1423 = vmatprep.subr.bf16.mxu0 0
    %1424 = vmatpush1.bf16.msra.mxu0 0
    %1425 = vmatprep.subr.bf16.mxu0 0
    %1426 = vmatpush1.bf16.msra.mxu0 0
    %1427 = vmatprep.subr.bf16.mxu0 0
    %1428 = vmatpush1.bf16.msra.mxu0 0
    %1429 = vmatprep.mubr.bf16.mxu0 0
    %1430 = vmatmul.mubr.bf16.gmra.mrb[0].mxu0 %v1350
    %v1431 = vpop.f32.mrb[0].mxu0
    %v1432 = vadd.f32 0.0, %v1431
    %v1433 = vpop.f32.mrb[0].mxu0
    %v1434 = vadd.f32 0.0, %v1433
    %v1435 = vpop.f32.mrb[0].mxu0
    %v1436 = vpop.f32.mrb[0].mxu0
    %1437 = vdwg.mxu0
    %v1438 = vadd.f32 %v1352, %v1391
    %v1439 = vadd.f32 %v1353, %v1393
    %v1440 = vadd.f32 %v1354, %v1432
    %v1441 = vadd.f32 %v1355, %v1434
    %v1442 = vxor.u32 %v1438, 2147483648
    %v1443 = vxor.u32 %v1439, 2147483648
    %v1444 = vxor.u32 %v1440, 2147483648
    %v1445 = vmul.f32 %v1442, 1.442695
    %v1446 = vpow.pop %v1445
    %v1447 = vmul.f32 %v1443, 1.442695
    %v1448 = vpow.pop %v1447
    %v1449 = vmul.f32 %v1444, 1.442695
    %v1450 = vpow.pop %v1449
    %v1451 = vadd.f32 %v1446, 1.0
    %v1452 = vadd.f32 %v1448, 1.0
    %v1453 = vadd.f32 %v1450, 1.0
    %v1454 = vrcp.pop %v1451
    %v1455 = vmul.f32 1.0, %v1454
    %v1456 = vrcp.pop %v1452
    %v1457 = vmul.f32 1.0, %v1456
    %v1458 = vrcp.pop %v1453
    %v1459 = vmul.f32 1.0, %v1458
    %v1460 = vtanh.pop %v1441
    %v1461 = vmul.f32 %v1457, %v1347
    %v1462 = vmul.f32 %v1455, %v1460
    %v1463 = vadd.f32 %v1461, %v1462
    %v1464 = vtanh.pop %v1463
    %v1465 = vmul.f32 %v1459, %v1464
    %v1466 = vpack.c.bf16 %v1465, %v1465
    %1467 = vst [vmem:[#allocation3] sm:$0xf] %v1466
    %1468 = vst [vmem:[#allocation4] sm:$0xff] %v1463
    // Predicated region
    $region50: #{lstm_net_forward.1} parent=1 // pred_check
      %p1469 = pneg %p91
    $region51: #{lstm_net_forward.1} parent=1 // pred_check_branch
      %1471 = sbr.rel (%p1469) target = $region53
    $region52: #{lstm_net_forward.1} parent=1 // pred_region
      %v1472 = vunpack.c.l.bf16 %v1466
      %v1473 = vld [vmem:[#allocation14] sm:$0x1]
      %v1475 = vlaneseq
      %v1476 = vshrl.u32 %v1475, 7
      %v1477 = vsub.s32 0, %v1476
      %v1478 = vrot.slane %v1473, %v1477
      %v1480 = vmul.f32 %v1472, %v1478
      %1481 = vadd.xlane.f32.xlu0 %v1480
      %v1482 = vpop.xlane.xlu0 %1481
      %v1483 = vld [vmem:[#allocation5] sm:$0x1]
      %v1485 = vlaneseq
      %v1486 = vshrl.u32 %v1485, 7
      %v1487 = vsub.s32 0, %v1486
      %v1488 = vrot.slane %v1483, %v1487
      %v1490 = vadd.f32 %v1482, %v1488
      %v1491 = vxor.u32 %v1490, 2147483648
      %v1492 = vmul.f32 %v1491, 1.442695
      %v1493 = vpow.pop %v1492
      %v1494 = vadd.f32 %v1493, 1.0
      %v1495 = vrcp.pop %v1494
      %v1496 = vmul.f32 1.0, %v1495
      %vm1497 = vcmask 7168
      %1498 = vst.msk [vmem:[#allocation15] sm:$0xff] %vm1497, %v1496
    $region53: #{lstm_net_forward.1} parent=1 // pred_fallthru
      _
    // Predicated region
    $region54: #{lstm_net_forward.1} parent=1 // pred_check
      _
    $region55: #{lstm_net_forward.1} parent=1 // pred_check_branch
      %1500 = sbr.rel (0) target = $region57
    $region56: #{lstm_net_forward.1} parent=1 // pred_region
      %s1502 = ssub.s32 128, 128
      %1503 = vsyncadd [#allocation8], %s1502
      %s1505 = sshll.u32 [#allocation15], 4
      %s1506 = int_to_ptr.vmem [resolvable:$true] %s1505
      %1508 = dma.vmem_to_hbm [thread:$0]  %s1506, 128, %s6, [#allocation8]
    $region57: #{lstm_net_forward.1} parent=1 // pred_fallthru
      _
    // Predicated region
    $region58: #{lstm_net_forward.1} parent=1 // pred_check
      _
    $region59: #{lstm_net_forward.1} parent=1 // pred_check_branch
      %1510 = sbr.rel (0) target = $region61
    $region60: #{lstm_net_forward.1} parent=1 // pred_region
      %1511 = dma.done [#allocation8], 128
    $region61: #{lstm_net_forward.1} parent=1 // pred_fallthru
      _
    %1512 = vsyncpa [#allocation7], 1
    %1513 = vsyncpa [#allocation10], 1
    %1514 = vsyncpa [#allocation13], 1
    %1515 = vsyncpa [#allocation8], 1

</llo_original>
